<compile_context>
chip_gen: v6e
topology: v6e:2x2x1
jax: 0.10.0
libtpu: 0.0.40
codegen_flags: <defaults>
</compile_context>

<pallas_src>
import functools

import jax
import jax.numpy as jnp
from jax.experimental import pallas as pl
from jax.experimental.pallas import tpu as pltpu


# 32 MiB: above the v5e/v6e scoped defaults (16/32 MiB) and leaves headroom
# inside v7x's 64 MiB physical VMEM for Mosaic internal scratch.
_VMEM_LIMIT = 32 * 1024 * 1024


def _cparams(*dims):
    return pltpu.CompilerParams(dimension_semantics=dims,
                                vmem_limit_bytes=_VMEM_LIMIT)


def _tile(dim, pref, align):
    """Largest multiple of `align` that divides `dim` and is <= `pref`.
    Falls back to the full dimension only if `dim` is not `align`-aligned."""
    if dim % align != 0:
        return dim
    t = min(pref, dim)
    t -= t % align
    while t >= align:
        if dim % t == 0:
            return t
        t -= align
    return dim


# ----------------------------------------------------------------------------
# Kernel 1: fused attention block, one call per layer:
#   pre-LN -> fused QKV projection -> causal multi-head attention
#   -> output projection -> residual add
# QKV / attention intermediates live only in VMEM scratch (never hit HBM).
# ----------------------------------------------------------------------------
def _attn_block_kernel(x_ref, g_ref, b_ref, wqkv_ref, bqkv_ref, wo_ref, bo_ref,
                       o_ref, qkv_sc, attn_sc, *, n_heads, d_head, eps, scale):
    L = x_ref.shape[1]
    D = n_heads * d_head

    # ---- pre-LayerNorm (f32) --------------------------------------------
    x = x_ref[0].astype(jnp.float32)                       # (L, D)
    mu = jnp.mean(x, axis=-1, keepdims=True)
    xc = x - mu
    var = jnp.mean(xc * xc, axis=-1, keepdims=True)
    h = xc * jax.lax.rsqrt(var + eps) * g_ref[...] + b_ref[...]

    # ---- fused QKV projection (bf16 MXU, f32 accumulate) ------------------
    qkv = jnp.dot(h.astype(jnp.bfloat16), wqkv_ref[...],
                  preferred_element_type=jnp.float32)
    qkv_sc[...] = qkv + bqkv_ref[...]                       # (L, 3D) f32 VMEM

    # ---- causal mask generated in-kernel (also masks padded key rows) -----
    row = jax.lax.broadcasted_iota(jnp.int32, (L, L), 0)
    col = jax.lax.broadcasted_iota(jnp.int32, (L, L), 1)
    neg_mask = jnp.where(col > row, jnp.float32(-1e9), jnp.float32(0.0))

    # ---- per-head scaled dot-product attention ----------------------------
    for hi in range(n_heads):                               # static head offsets
        lo = hi * d_head
        q = qkv_sc[:, lo:lo + d_head].astype(jnp.bfloat16)
        k = qkv_sc[:, D + lo:D + lo + d_head].astype(jnp.bfloat16)
        v = qkv_sc[:, 2 * D + lo:2 * D + lo + d_head].astype(jnp.bfloat16)
        # q @ k^T (contract last dims, no explicit transpose)
        s = jax.lax.dot_general(q, k, (((1,), (1,)), ((), ())),
                                preferred_element_type=jnp.float32)
        s = s * scale + neg_mask
        m = jnp.max(s, axis=-1, keepdims=True)
        p = jnp.exp(s - m)                                  # f32 softmax
        p = p * pl.reciprocal(jnp.sum(p, axis=-1, keepdims=True), approx=False)
        o = jnp.dot(p.astype(jnp.bfloat16), v, preferred_element_type=jnp.float32)
        attn_sc[:, lo:lo + d_head] = o                      # store bounds live range

    # ---- output projection + residual (fused epilogue) --------------------
    y = jnp.dot(attn_sc[...].astype(jnp.bfloat16), wo_ref[...],
                preferred_element_type=jnp.float32)
    o_ref[0] = x_ref[0] + y + bo_ref[...]


def attn_block(x, g, b, w_qkv, b_qkv, wo, bo, *, n_heads, d_head, eps=1e-5):
    B, Lp, D = x.shape
    scale = 1.0 / (d_head ** 0.5)
    kernel = functools.partial(_attn_block_kernel, n_heads=n_heads,
                               d_head=d_head, eps=eps, scale=scale)
    flops = B * (2 * Lp * D * 3 * D + 4 * n_heads * Lp * Lp * d_head
                 + 2 * Lp * D * D)
    return pl.pallas_call(
        kernel,
        out_shape=jax.ShapeDtypeStruct((B, Lp, D), jnp.float32),
        grid=(B,),
        in_specs=[pl.BlockSpec((1, Lp, D), lambda i: (i, 0, 0)),
                  pl.BlockSpec((1, D), lambda i: (0, 0)),
                  pl.BlockSpec((1, D), lambda i: (0, 0)),
                  pl.BlockSpec((D, 3 * D), lambda i: (0, 0)),
                  pl.BlockSpec((1, 3 * D), lambda i: (0, 0)),
                  pl.BlockSpec((D, D), lambda i: (0, 0)),
                  pl.BlockSpec((1, D), lambda i: (0, 0))],
        out_specs=pl.BlockSpec((1, Lp, D), lambda i: (i, 0, 0)),
        scratch_shapes=[pltpu.VMEM((Lp, 3 * D), jnp.float32),
                        pltpu.VMEM((Lp, D), jnp.float32)],
        compiler_params=_cparams("parallel"),
        cost_estimate=pl.CostEstimate(
            flops=flops,
            transcendentals=B * (n_heads * Lp * Lp + Lp),
            bytes_accessed=2 * B * Lp * D * 4 + (w_qkv.size + wo.size) * 2),
    )(x, g.reshape(1, D), b.reshape(1, D), w_qkv, b_qkv.reshape(1, 3 * D),
      wo, bo.reshape(1, D))


# ----------------------------------------------------------------------------
# Kernel 2: fused pre-LN + quick-GELU MLP + residual, tiled over d_mlp as a
# K-reduction with an f32 VMEM accumulator.  The LayerNorm result is computed
# once per M tile (at f == 0) into a bf16 VMEM scratch and reused across all
# d_mlp reduction steps.
# ----------------------------------------------------------------------------
def _ln_mlp_kernel(x_ref, g_ref, b_ref, w1_ref, b1_ref, w2_ref, b2_ref,
                   o_ref, acc_ref, h_sc, *, eps):
    f = pl.program_id(1)

    @pl.when(f == 0)
    def _():
        x = x_ref[...].astype(jnp.float32)
        mu = jnp.mean(x, axis=-1, keepdims=True)
        xc = x - mu
        var = jnp.mean(xc * xc, axis=-1, keepdims=True)
        h = xc * jax.lax.rsqrt(var + eps) * g_ref[...] + b_ref[...]
        h_sc[...] = h.astype(jnp.bfloat16)                 # LN cached across f
        acc_ref[...] = x_ref[...] + b2_ref[...]            # residual + fc2 bias

    a = jnp.dot(h_sc[...], w1_ref[...],
                preferred_element_type=jnp.float32) + b1_ref[...]
    a = a * jax.nn.sigmoid(1.702 * a)                      # quick_gelu in f32
    acc_ref[...] += jnp.dot(a.astype(jnp.bfloat16), w2_ref[...],
                            preferred_element_type=jnp.float32)

    @pl.when(f == pl.num_programs(1) - 1)
    def _():
        o_ref[...] = acc_ref[...]


def ln_mlp_residual(x, g, b, w1, b1, w2, b2, *, eps=1e-5, tm=128, tf=768):
    M, D = x.shape
    F = w1.shape[1]
    tm = _tile(M, tm, 8)          # sublane-aligned M tiles (parallel axis)
    tf = _tile(F, tf, 128)        # lane-aligned d_mlp tiles (weight pipelining)
    kernel = functools.partial(_ln_mlp_kernel, eps=eps)
    return pl.pallas_call(
        kernel,
        out_shape=jax.ShapeDtypeStruct((M, D), jnp.float32),
        grid=(M // tm, F // tf),
        in_specs=[pl.BlockSpec((tm, D), lambda i, f: (i, 0)),
                  pl.BlockSpec((1, D), lambda i, f: (0, 0)),
                  pl.BlockSpec((1, D), lambda i, f: (0, 0)),
                  pl.BlockSpec((D, tf), lambda i, f: (0, f)),
                  pl.BlockSpec((1, tf), lambda i, f: (0, f)),
                  pl.BlockSpec((tf, D), lambda i, f: (f, 0)),
                  pl.BlockSpec((1, D), lambda i, f: (0, 0))],
        out_specs=pl.BlockSpec((tm, D), lambda i, f: (i, 0)),
        scratch_shapes=[pltpu.VMEM((tm, D), jnp.float32),
                        pltpu.VMEM((tm, D), jnp.bfloat16)],
        compiler_params=_cparams("parallel", "arbitrary"),
        cost_estimate=pl.CostEstimate(
            flops=4 * M * D * F, transcendentals=M * F + M,
            bytes_accessed=2 * M * D * 4 + (w1.size + w2.size) * 2),
    )(x, g.reshape(1, D), b.reshape(1, D), w1, b1.reshape(1, F),
      w2, b2.reshape(1, D))


# ----------------------------------------------------------------------------
# Kernel 3: final LayerNorm, row-tiled
# ----------------------------------------------------------------------------
def _layernorm_kernel(x_ref, g_ref, b_ref, o_ref, *, eps):
    x = x_ref[...].astype(jnp.float32)
    mu = jnp.mean(x, axis=-1, keepdims=True)
    xc = x - mu
    var = jnp.mean(xc * xc, axis=-1, keepdims=True)
    o_ref[...] = xc * jax.lax.rsqrt(var + eps) * g_ref[...] + b_ref[...]


def pallas_layernorm(x, g, b, *, eps=1e-5, tm=256):
    M, D = x.shape
    tm = _tile(M, tm, 8)
    kernel = functools.partial(_layernorm_kernel, eps=eps)
    return pl.pallas_call(
        kernel,
        out_shape=jax.ShapeDtypeStruct((M, D), jnp.float32),
        grid=(M // tm,),
        in_specs=[pl.BlockSpec((tm, D), lambda i: (i, 0)),
                  pl.BlockSpec((1, D), lambda i: (0, 0)),
                  pl.BlockSpec((1, D), lambda i: (0, 0))],
        out_specs=pl.BlockSpec((tm, D), lambda i: (i, 0)),
        compiler_params=_cparams("parallel"),
    )(x, g.reshape(1, D), b.reshape(1, D))


# ----------------------------------------------------------------------------
# Parameter init (weights bf16 for the MXU; LN params / biases / embeddings f32)
# ----------------------------------------------------------------------------
def init_clip_params(key, vocab, d, n_layers, n_heads, d_mlp, max_len):
    keys = iter(jax.random.split(key, 2 + 4 * n_layers))

    def w(shape, scale=0.02):
        return jax.random.normal(next(keys), shape, jnp.float32) * scale

    p = {
        "tok_emb": w((vocab, d)),
        "pos_emb": w((max_len, d), 0.01),
        "lnf_g": jnp.ones((d,), jnp.float32),
        "lnf_b": jnp.zeros((d,), jnp.float32),
        "layers": [],
    }
    for _ in range(n_layers):
        p["layers"].append({
            "ln1_g": jnp.ones((d,), jnp.float32),
            "ln1_b": jnp.zeros((d,), jnp.float32),
            "w_qkv": w((d, 3 * d)).astype(jnp.bfloat16),     # [Wq | Wk | Wv]
            "b_qkv": jnp.zeros((3 * d,), jnp.float32),
            "wo": w((d, d)).astype(jnp.bfloat16),
            "bo": jnp.zeros((d,), jnp.float32),
            "ln2_g": jnp.ones((d,), jnp.float32),
            "ln2_b": jnp.zeros((d,), jnp.float32),
            "fc1_w": w((d, d_mlp)).astype(jnp.bfloat16),
            "fc1_b": jnp.zeros((d_mlp,), jnp.float32),
            "fc2_w": w((d_mlp, d)).astype(jnp.bfloat16),
            "fc2_b": jnp.zeros((d,), jnp.float32),
        })
    return p


# ----------------------------------------------------------------------------
# FrozenCLIPEmbedder.forward  (pre-tokenized ids -> hidden states)
# ----------------------------------------------------------------------------
# TODO(synk): CLIPTokenizer (string -> token ids) and HF checkpoint loading
# have no Pallas equivalent; this consumes pre-tokenized int32 ids.
def clip_text_forward(tokens, p, n_heads, layer="last", layer_idx=None):
    B, L = tokens.shape
    D = p["tok_emb"].shape[1]
    dh = D // n_heads

    # Pad the sequence to a sublane-aligned length; the causal mask keeps the
    # zero-padded key rows from ever influencing the real rows.
    Lp = ((L + 7) // 8) * 8

    x = p["tok_emb"][tokens] + p["pos_emb"][None, :L, :]          # (B, L, D) f32
    if Lp != L:
        x = jnp.pad(x, ((0, 0), (0, Lp - L), (0, 0)))
    hidden_states = [x[:, :L, :]]

    for lyr in p["layers"]:
        # fused: pre-LN + QKV proj + causal MHA + out-proj + residual
        x = attn_block(x, lyr["ln1_g"], lyr["ln1_b"],
                       lyr["w_qkv"], lyr["b_qkv"], lyr["wo"], lyr["bo"],
                       n_heads=n_heads, d_head=dh, eps=1e-5)
        # fused: pre-LN + quick-GELU MLP + residual, tiled over d_mlp
        xf = ln_mlp_residual(x.reshape(B * Lp, D), lyr["ln2_g"], lyr["ln2_b"],
                             lyr["fc1_w"], lyr["fc1_b"],
                             lyr["fc2_w"], lyr["fc2_b"], eps=1e-5)
        x = xf.reshape(B, Lp, D)
        hidden_states.append(x[:, :L, :])

    last = pallas_layernorm(x.reshape(B * Lp, D), p["lnf_g"], p["lnf_b"],
                            eps=1e-5).reshape(B, Lp, D)[:, :L, :]

    if layer == "last":
        return last                                             # last_hidden_state
    if layer == "pooled":                                       # pooler_output[:, None, :]
        eot = jnp.argmax(tokens, axis=-1)
        return last[jnp.arange(B), eot][:, None, :]
    return hidden_states[layer_idx]                             # 'hidden'


frozen_clip_embed = jax.jit(clip_text_forward,
                            static_argnames=("n_heads", "layer", "layer_idx"))


# ----------------------------------------------------------------------------
if __name__ == "__main__":
    B, L = 2, 7            # small stand-in for (batch, max_length=77); L=7 exercises padding
    VOCAB = 1000
    D = 64                 # small stand-in for 768
    HEADS = 4              # small stand-in for 12  (dh = 16)
    D_MLP = 4 * D
    N_LAYERS = 2           # small stand-in for 12
    MAX_LEN = 77

    key = jax.random.PRNGKey(0)
    k_tok, k_par = jax.random.split(key)

    tokens = jax.random.randint(k_tok, (B, L), 0, VOCAB, dtype=jnp.int32)
    params = init_clip_params(k_par, vocab=VOCAB, d=D, n_layers=N_LAYERS,
                              n_heads=HEADS, d_mlp=D_MLP, max_len=MAX_LEN)

    z = frozen_clip_embed(tokens, params, n_heads=HEADS)   # layer='last' default
    z = jax.block_until_ready(z)

    assert z.shape == (B, L, D) and z.dtype == jnp.float32
    assert bool(jnp.all(jnp.isfinite(z)))
    print("KERNEL_OK")
</pallas_src>

<mosaic_0001>
module attributes {stable_mosaic.version = 11 : i64} {
  func.func @_ln_mlp_kernel(%arg0: i32, %arg1: i32, %arg2: memref<16x64xf32, #tpu.memory_space<vmem>>, %arg3: memref<1x64xf32, #tpu.memory_space<vmem>>, %arg4: memref<1x64xf32, #tpu.memory_space<vmem>>, %arg5: memref<64x256xbf16, #tpu.memory_space<vmem>>, %arg6: memref<1x256xf32, #tpu.memory_space<vmem>>, %arg7: memref<256x64xbf16, #tpu.memory_space<vmem>>, %arg8: memref<1x64xf32, #tpu.memory_space<vmem>>, %arg9: memref<16x64xf32, #tpu.memory_space<vmem>>, %arg10: memref<16x64xf32, #tpu.memory_space<vmem>>, %arg11: memref<16x64xbf16, #tpu.memory_space<vmem>>) attributes {dimension_semantics = [#tpu.dimension_semantics<parallel>, #tpu.dimension_semantics<arbitrary>], iteration_bounds = array<i64: 1, 1>, scalar_prefetch = 0 : i64, scratch_operands = 2 : i64, tpu.core_type = #tpu.core_type<tc>, window_params = [{transform_indices = @transform_0, window_bounds = array<i64: 16, 64>}, {pipeline_mode = #tpu.pipeline_mode<synchronous>, transform_indices = @transform_1, window_bounds = array<i64: 1, 64>}, {pipeline_mode = #tpu.pipeline_mode<synchronous>, transform_indices = @transform_2, window_bounds = array<i64: 1, 64>}, {transform_indices = @transform_3, window_bounds = array<i64: 64, 256>}, {transform_indices = @transform_4, window_bounds = array<i64: 1, 256>}, {transform_indices = @transform_5, window_bounds = array<i64: 256, 64>}, {pipeline_mode = #tpu.pipeline_mode<synchronous>, transform_indices = @transform_6, window_bounds = array<i64: 1, 64>}, {transform_indices = @transform_7, window_bounds = array<i64: 16, 64>}]} {
    %c0_i32 = arith.constant 0 : i32
    %0 = arith.cmpi eq, %arg1, %c0_i32 : i32
    %1 = arith.extui %0 : i1 to i32
    %c0_i32_0 = arith.constant 0 : i32
    %2 = arith.cmpi ne, %1, %c0_i32_0 : i32
    scf.if %2 {
      %c0_17 = arith.constant 0 : index
      %c0_18 = arith.constant 0 : index
      %26 = vector.load %arg2[%c0_17, %c0_18] : memref<16x64xf32, #tpu.memory_space<vmem>>, vector<16x64xf32>
      %cst_19 = arith.constant dense<0.000000e+00> : vector<16xf32>
      %27 = vector.multi_reduction <add>, %26, %cst_19 [1] : vector<16x64xf32> to vector<16xf32>
      %28 = vector.shape_cast %27 : vector<16xf32> to vector<16x1xf32>
      %cst_20 = arith.constant 6.400000e+01 : f32
      %29 = vector.broadcast %cst_20 : f32 to vector<16x1xf32>
      %30 = arith.divf %28, %29 : vector<16x1xf32>
      %31 = vector.broadcast %30 : vector<16x1xf32> to vector<16x64xf32>
      %32 = arith.subf %26, %31 : vector<16x64xf32>
      %33 = arith.mulf %32, %32 : vector<16x64xf32>
      %cst_21 = arith.constant dense<0.000000e+00> : vector<16xf32>
      %34 = vector.multi_reduction <add>, %33, %cst_21 [1] : vector<16x64xf32> to vector<16xf32>
      %35 = vector.shape_cast %34 : vector<16xf32> to vector<16x1xf32>
      %cst_22 = arith.constant 6.400000e+01 : f32
      %36 = vector.broadcast %cst_22 : f32 to vector<16x1xf32>
      %37 = arith.divf %35, %36 : vector<16x1xf32>
      %cst_23 = arith.constant 9.99999974E-6 : f32
      %38 = vector.broadcast %cst_23 : f32 to vector<16x1xf32>
      %39 = arith.addf %37, %38 : vector<16x1xf32>
      %40 = math.rsqrt %39 : vector<16x1xf32>
      %41 = vector.broadcast %40 : vector<16x1xf32> to vector<16x64xf32>
      %42 = arith.mulf %32, %41 : vector<16x64xf32>
      %c0_24 = arith.constant 0 : index
      %c0_25 = arith.constant 0 : index
      %43 = vector.load %arg3[%c0_24, %c0_25] : memref<1x64xf32, #tpu.memory_space<vmem>>, vector<1x64xf32>
      %44 = vector.broadcast %43 : vector<1x64xf32> to vector<16x64xf32>
      %45 = arith.mulf %42, %44 : vector<16x64xf32>
      %c0_26 = arith.constant 0 : index
      %c0_27 = arith.constant 0 : index
      %46 = vector.load %arg4[%c0_26, %c0_27] : memref<1x64xf32, #tpu.memory_space<vmem>>, vector<1x64xf32>
      %47 = vector.broadcast %46 : vector<1x64xf32> to vector<16x64xf32>
      %48 = arith.addf %45, %47 : vector<16x64xf32>
      %49 = arith.truncf %48 : vector<16x64xf32> to vector<16x64xbf16>
      %c0_28 = arith.constant 0 : index
      %c0_29 = arith.constant 0 : index
      %50 = vector.load %arg11[%c0_28, %c0_29] : memref<16x64xbf16, #tpu.memory_space<vmem>>, vector<16x64xbf16>
      tpu.vector_store %arg11[%c0_28, %c0_29], %49 {strides = array<i32>} : memref<16x64xbf16, #tpu.memory_space<vmem>>, vector<16x64xbf16>,
      %c0_30 = arith.constant 0 : index
      %c0_31 = arith.constant 0 : index
      %51 = vector.load %arg2[%c0_30, %c0_31] : memref<16x64xf32, #tpu.memory_space<vmem>>, vector<16x64xf32>
      %c0_32 = arith.constant 0 : index
      %c0_33 = arith.constant 0 : index
      %52 = vector.load %arg8[%c0_32, %c0_33] : memref<1x64xf32, #tpu.memory_space<vmem>>, vector<1x64xf32>
      %53 = vector.broadcast %52 : vector<1x64xf32> to vector<16x64xf32>
      %54 = arith.addf %51, %53 : vector<16x64xf32>
      %c0_34 = arith.constant 0 : index
      %c0_35 = arith.constant 0 : index
      %55 = vector.load %arg10[%c0_34, %c0_35] : memref<16x64xf32, #tpu.memory_space<vmem>>, vector<16x64xf32>
      tpu.vector_store %arg10[%c0_34, %c0_35], %54 {strides = array<i32>} : memref<16x64xf32, #tpu.memory_space<vmem>>, vector<16x64xf32>,
    } else {
    }
    %c0 = arith.constant 0 : index
    %c0_1 = arith.constant 0 : index
    %3 = vector.load %arg11[%c0, %c0_1] : memref<16x64xbf16, #tpu.memory_space<vmem>>, vector<16x64xbf16>
    %c0_2 = arith.constant 0 : index
    %c0_3 = arith.constant 0 : index
    %4 = vector.load %arg5[%c0_2, %c0_3] : memref<64x256xbf16, #tpu.memory_space<vmem>>, vector<64x256xbf16>
    %cst = arith.constant dense<0.000000e+00> : vector<16x256xf32>
    %5 = tpu.matmul %3, %4, %cst {dimension_numbers = #tpu.dot_dimension_numbers<[1], [0], [0], [1], [0, 0, 1, 1], [], []>} : vector<16x64xbf16>, vector<64x256xbf16>, vector<16x256xf32> -> vector<16x256xf32>
    %c0_4 = arith.constant 0 : index
    %c0_5 = arith.constant 0 : index
    %6 = vector.load %arg6[%c0_4, %c0_5] : memref<1x256xf32, #tpu.memory_space<vmem>>, vector<1x256xf32>
    %7 = vector.broadcast %6 : vector<1x256xf32> to vector<16x256xf32>
    %8 = arith.addf %5, %7 : vector<16x256xf32>
    %cst_6 = arith.constant 1.702000e+00 : f32
    %9 = vector.broadcast %cst_6 : f32 to vector<16x256xf32>
    %10 = arith.mulf %9, %8 : vector<16x256xf32>
    %11 = arith.negf %10 : vector<16x256xf32>
    %12 = math.exp %11 : vector<16x256xf32>
    %cst_7 = arith.constant 1.000000e+00 : f32
    %13 = vector.broadcast %cst_7 : f32 to vector<16x256xf32>
    %14 = arith.addf %13, %12 : vector<16x256xf32>
    %15 = arith.divf %13, %14 : vector<16x256xf32>
    %16 = arith.mulf %8, %15 : vector<16x256xf32>
    %c0_8 = arith.constant 0 : index
    %c0_9 = arith.constant 0 : index
    %17 = vector.load %arg10[%c0_8, %c0_9] : memref<16x64xf32, #tpu.memory_space<vmem>>, vector<16x64xf32>
    %18 = arith.truncf %16 : vector<16x256xf32> to vector<16x256xbf16>
    %c0_10 = arith.constant 0 : index
    %c0_11 = arith.constant 0 : index
    %19 = vector.load %arg7[%c0_10, %c0_11] : memref<256x64xbf16, #tpu.memory_space<vmem>>, vector<256x64xbf16>
    %cst_12 = arith.constant dense<0.000000e+00> : vector<16x64xf32>
    %20 = tpu.matmul %18, %19, %cst_12 {dimension_numbers = #tpu.dot_dimension_numbers<[1], [0], [0], [1], [0, 0, 1, 1], [], []>} : vector<16x256xbf16>, vector<256x64xbf16>, vector<16x64xf32> -> vector<16x64xf32>
    %21 = arith.addf %17, %20 : vector<16x64xf32>
    %c0_13 = arith.constant 0 : index
    %c0_14 = arith.constant 0 : index
    %22 = vector.load %arg10[%c0_13, %c0_14] : memref<16x64xf32, #tpu.memory_space<vmem>>, vector<16x64xf32>
    tpu.vector_store %arg10[%c0_13, %c0_14], %21 {strides = array<i32>} : memref<16x64xf32, #tpu.memory_space<vmem>>, vector<16x64xf32>,
    %c0_i32_15 = arith.constant 0 : i32
    %23 = arith.cmpi eq, %arg1, %c0_i32_15 : i32
    %24 = arith.extui %23 : i1 to i32
    %c0_i32_16 = arith.constant 0 : i32
    %25 = arith.cmpi ne, %24, %c0_i32_16 : i32
    scf.if %25 {
      %c0_17 = arith.constant 0 : index
      %c0_18 = arith.constant 0 : index
      %26 = vector.load %arg10[%c0_17, %c0_18] : memref<16x64xf32, #tpu.memory_space<vmem>>, vector<16x64xf32>
      %c0_19 = arith.constant 0 : index
      %c0_20 = arith.constant 0 : index
      %27 = vector.load %arg9[%c0_19, %c0_20] : memref<16x64xf32, #tpu.memory_space<vmem>>, vector<16x64xf32>
      tpu.vector_store %arg9[%c0_19, %c0_20], %26 {strides = array<i32>} : memref<16x64xf32, #tpu.memory_space<vmem>>, vector<16x64xf32>,
    } else {
    }
    return
  }
  func.func @transform_0(%arg0: i32, %arg1: i32) -> (i32, i32) {
    %c0_i32 = arith.constant 0 : i32
    %c0_i32_0 = arith.constant 0 : i32
    return %arg0, %c0_i32 : i32, i32
  }
  func.func @transform_1(%arg0: i32, %arg1: i32) -> (i32, i32) {
    %c0_i32 = arith.constant 0 : i32
    %c0_i32_0 = arith.constant 0 : i32
    %c0_i32_1 = arith.constant 0 : i32
    return %c0_i32, %c0_i32_0 : i32, i32
  }
  func.func @transform_2(%arg0: i32, %arg1: i32) -> (i32, i32) {
    %c0_i32 = arith.constant 0 : i32
    %c0_i32_0 = arith.constant 0 : i32
    %c0_i32_1 = arith.constant 0 : i32
    return %c0_i32, %c0_i32_0 : i32, i32
  }
  func.func @transform_3(%arg0: i32, %arg1: i32) -> (i32, i32) {
    %c0_i32 = arith.constant 0 : i32
    %c0_i32_0 = arith.constant 0 : i32
    return %c0_i32, %arg1 : i32, i32
  }
  func.func @transform_4(%arg0: i32, %arg1: i32) -> (i32, i32) {
    %c0_i32 = arith.constant 0 : i32
    %c0_i32_0 = arith.constant 0 : i32
    return %c0_i32, %arg1 : i32, i32
  }
  func.func @transform_5(%arg0: i32, %arg1: i32) -> (i32, i32) {
    %c0_i32 = arith.constant 0 : i32
    %c0_i32_0 = arith.constant 0 : i32
    return %arg1, %c0_i32 : i32, i32
  }
  func.func @transform_6(%arg0: i32, %arg1: i32) -> (i32, i32) {
    %c0_i32 = arith.constant 0 : i32
    %c0_i32_0 = arith.constant 0 : i32
    %c0_i32_1 = arith.constant 0 : i32
    return %c0_i32, %c0_i32_0 : i32, i32
  }
  func.func @transform_7(%arg0: i32, %arg1: i32) -> (i32, i32) {
    %c0_i32 = arith.constant 0 : i32
    %c0_i32_0 = arith.constant 0 : i32
    return %arg0, %c0_i32 : i32, i32
  }
}

module attributes {stable_mosaic.version = 11 : i64} {
  func.func @_attn_block_kernel(%arg0: i32, %arg1: memref<1x8x64xf32, #tpu.memory_space<vmem>>, %arg2: memref<1x64xf32, #tpu.memory_space<vmem>>, %arg3: memref<1x64xf32, #tpu.memory_space<vmem>>, %arg4: memref<64x192xbf16, #tpu.memory_space<vmem>>, %arg5: memref<1x192xf32, #tpu.memory_space<vmem>>, %arg6: memref<64x64xbf16, #tpu.memory_space<vmem>>, %arg7: memref<1x64xf32, #tpu.memory_space<vmem>>, %arg8: memref<1x8x64xf32, #tpu.memory_space<vmem>>, %arg9: memref<8x192xf32, #tpu.memory_space<vmem>>, %arg10: memref<8x64xf32, #tpu.memory_space<vmem>>) attributes {dimension_semantics = [#tpu.dimension_semantics<parallel>], iteration_bounds = array<i64: 2>, scalar_prefetch = 0 : i64, scratch_operands = 2 : i64, tpu.core_type = #tpu.core_type<tc>, window_params = [{transform_indices = @transform_0, window_bounds = array<i64: 1, 8, 64>}, {pipeline_mode = #tpu.pipeline_mode<synchronous>, transform_indices = @transform_1, window_bounds = array<i64: 1, 64>}, {pipeline_mode = #tpu.pipeline_mode<synchronous>, transform_indices = @transform_2, window_bounds = array<i64: 1, 64>}, {pipeline_mode = #tpu.pipeline_mode<synchronous>, transform_indices = @transform_3, window_bounds = array<i64: 64, 192>}, {pipeline_mode = #tpu.pipeline_mode<synchronous>, transform_indices = @transform_4, window_bounds = array<i64: 1, 192>}, {pipeline_mode = #tpu.pipeline_mode<synchronous>, transform_indices = @transform_5, window_bounds = array<i64: 64, 64>}, {pipeline_mode = #tpu.pipeline_mode<synchronous>, transform_indices = @transform_6, window_bounds = array<i64: 1, 64>}, {transform_indices = @transform_7, window_bounds = array<i64: 1, 8, 64>}]} {
    %c0 = arith.constant 0 : index
    %c0_0 = arith.constant 0 : index
    %c0_1 = arith.constant 0 : index
    %0 = vector.load %arg1[%c0, %c0_0, %c0_1] : memref<1x8x64xf32, #tpu.memory_space<vmem>>, vector<1x8x64xf32>
    %1 = vector.shape_cast %0 : vector<1x8x64xf32> to vector<8x64xf32>
    %cst = arith.constant dense<0.000000e+00> : vector<8xf32>
    %2 = vector.multi_reduction <add>, %1, %cst [1] : vector<8x64xf32> to vector<8xf32>
    %3 = vector.shape_cast %2 : vector<8xf32> to vector<8x1xf32>
    %cst_2 = arith.constant 6.400000e+01 : f32
    %4 = vector.broadcast %cst_2 : f32 to vector<8x1xf32>
    %5 = arith.divf %3, %4 : vector<8x1xf32>
    %6 = vector.broadcast %5 : vector<8x1xf32> to vector<8x64xf32>
    %7 = arith.subf %1, %6 : vector<8x64xf32>
    %8 = arith.mulf %7, %7 : vector<8x64xf32>
    %cst_3 = arith.constant dense<0.000000e+00> : vector<8xf32>
    %9 = vector.multi_reduction <add>, %8, %cst_3 [1] : vector<8x64xf32> to vector<8xf32>
    %10 = vector.shape_cast %9 : vector<8xf32> to vector<8x1xf32>
    %cst_4 = arith.constant 6.400000e+01 : f32
    %11 = vector.broadcast %cst_4 : f32 to vector<8x1xf32>
    %12 = arith.divf %10, %11 : vector<8x1xf32>
    %cst_5 = arith.constant 9.99999974E-6 : f32
    %13 = vector.broadcast %cst_5 : f32 to vector<8x1xf32>
    %14 = arith.addf %12, %13 : vector<8x1xf32>
    %15 = math.rsqrt %14 : vector<8x1xf32>
    %16 = vector.broadcast %15 : vector<8x1xf32> to vector<8x64xf32>
    %17 = arith.mulf %7, %16 : vector<8x64xf32>
    %c0_6 = arith.constant 0 : index
    %c0_7 = arith.constant 0 : index
    %18 = vector.load %arg2[%c0_6, %c0_7] : memref<1x64xf32, #tpu.memory_space<vmem>>, vector<1x64xf32>
    %19 = vector.broadcast %18 : vector<1x64xf32> to vector<8x64xf32>
    %20 = arith.mulf %17, %19 : vector<8x64xf32>
    %c0_8 = arith.constant 0 : index
    %c0_9 = arith.constant 0 : index
    %21 = vector.load %arg3[%c0_8, %c0_9] : memref<1x64xf32, #tpu.memory_space<vmem>>, vector<1x64xf32>
    %22 = vector.broadcast %21 : vector<1x64xf32> to vector<8x64xf32>
    %23 = arith.addf %20, %22 : vector<8x64xf32>
    %24 = arith.truncf %23 : vector<8x64xf32> to vector<8x64xbf16>
    %c0_10 = arith.constant 0 : index
    %c0_11 = arith.constant 0 : index
    %25 = vector.load %arg4[%c0_10, %c0_11] : memref<64x192xbf16, #tpu.memory_space<vmem>>, vector<64x192xbf16>
    %cst_12 = arith.constant dense<0.000000e+00> : vector<8x192xf32>
    %26 = tpu.matmul %24, %25, %cst_12 {dimension_numbers = #tpu.dot_dimension_numbers<[1], [0], [0], [1], [0, 0, 1, 1], [], []>} : vector<8x64xbf16>, vector<64x192xbf16>, vector<8x192xf32> -> vector<8x192xf32>
    %c0_13 = arith.constant 0 : index
    %c0_14 = arith.constant 0 : index
    %27 = vector.load %arg5[%c0_13, %c0_14] : memref<1x192xf32, #tpu.memory_space<vmem>>, vector<1x192xf32>
    %28 = vector.broadcast %27 : vector<1x192xf32> to vector<8x192xf32>
    %29 = arith.addf %26, %28 : vector<8x192xf32>
    %c0_15 = arith.constant 0 : index
    %c0_16 = arith.constant 0 : index
    %30 = vector.load %arg9[%c0_15, %c0_16] : memref<8x192xf32, #tpu.memory_space<vmem>>, vector<8x192xf32>
    tpu.vector_store %arg9[%c0_15, %c0_16], %29 {strides = array<i32>} : memref<8x192xf32, #tpu.memory_space<vmem>>, vector<8x192xf32>,
    %31 = tpu.iota {dimensions = array<i32: 0>} : vector<8x8xi32>
    %32 = tpu.iota {dimensions = array<i32: 1>} : vector<8x8xi32>
    %33 = arith.cmpi sgt, %32, %31 : vector<8x8xi32>
    %cst_17 = arith.constant -1.000000e+09 : f32
    %cst_18 = arith.constant 0.000000e+00 : f32
    %34 = vector.broadcast %cst_17 : f32 to vector<8x8xf32>
    %35 = vector.broadcast %cst_18 : f32 to vector<8x8xf32>
    %36 = arith.select %33, %34, %35 : vector<8x8xi1>, vector<8x8xf32>
    %c0_19 = arith.constant 0 : index
    %c0_20 = arith.constant 0 : index
    %37 = vector.load %arg9[%c0_19, %c0_20] : memref<8x192xf32, #tpu.memory_space<vmem>>, vector<8x16xf32>
    %38 = arith.truncf %37 : vector<8x16xf32> to vector<8x16xbf16>
    %c0_21 = arith.constant 0 : index
    %c64 = arith.constant 64 : index
    %39 = vector.load %arg9[%c0_21, %c64] : memref<8x192xf32, #tpu.memory_space<vmem>>, vector<8x16xf32>
    %40 = arith.truncf %39 : vector<8x16xf32> to vector<8x16xbf16>
    %c0_22 = arith.constant 0 : index
    %c128 = arith.constant 128 : index
    %41 = vector.load %arg9[%c0_22, %c128] : memref<8x192xf32, #tpu.memory_space<vmem>>, vector<8x16xf32>
    %42 = arith.truncf %41 : vector<8x16xf32> to vector<8x16xbf16>
    %cst_23 = arith.constant dense<0.000000e+00> : vector<8x8xf32>
    %43 = tpu.matmul %38, %40, %cst_23 {dimension_numbers = #tpu.dot_dimension_numbers<[1], [1], [0], [0], [0, 0, 1, 0], [], []>} : vector<8x16xbf16>, vector<8x16xbf16>, vector<8x8xf32> -> vector<8x8xf32>
    %cst_24 = arith.constant 2.500000e-01 : f32
    %44 = vector.broadcast %cst_24 : f32 to vector<8x8xf32>
    %45 = arith.mulf %43, %44 : vector<8x8xf32>
    %46 = arith.addf %45, %36 : vector<8x8xf32>
    %cst_25 = arith.constant dense<0xFF800000> : vector<8xf32>
    %47 = vector.multi_reduction <maximumf>, %46, %cst_25 [1] : vector<8x8xf32> to vector<8xf32>
    %48 = vector.shape_cast %47 : vector<8xf32> to vector<8x1xf32>
    %49 = vector.broadcast %48 : vector<8x1xf32> to vector<8x8xf32>
    %50 = arith.subf %46, %49 : vector<8x8xf32>
    %51 = math.exp %50 : vector<8x8xf32>
    %cst_26 = arith.constant dense<0.000000e+00> : vector<8xf32>
    %52 = vector.multi_reduction <add>, %51, %cst_26 [1] : vector<8x8xf32> to vector<8xf32>
    %53 = vector.shape_cast %52 : vector<8xf32> to vector<8x1xf32>
    %54 = tpu.reciprocal %53 : vector<8x1xf32> -> vector<8x1xf32>
    %55 = vector.broadcast %54 : vector<8x1xf32> to vector<8x8xf32>
    %56 = arith.mulf %51, %55 : vector<8x8xf32>
    %57 = arith.truncf %56 : vector<8x8xf32> to vector<8x8xbf16>
    %cst_27 = arith.constant dense<0.000000e+00> : vector<8x16xf32>
    %58 = tpu.matmul %57, %42, %cst_27 {dimension_numbers = #tpu.dot_dimension_numbers<[1], [0], [0], [1], [0, 0, 1, 1], [], []>} : vector<8x8xbf16>, vector<8x16xbf16>, vector<8x16xf32> -> vector<8x16xf32>
    %c0_28 = arith.constant 0 : index
    %c0_29 = arith.constant 0 : index
    %59 = vector.load %arg10[%c0_28, %c0_29] : memref<8x64xf32, #tpu.memory_space<vmem>>, vector<8x16xf32>
    tpu.vector_store %arg10[%c0_28, %c0_29], %58 {strides = array<i32>} : memref<8x64xf32, #tpu.memory_space<vmem>>, vector<8x16xf32>,
    %c0_30 = arith.constant 0 : index
    %c16 = arith.constant 16 : index
    %60 = vector.load %arg9[%c0_30, %c16] : memref<8x192xf32, #tpu.memory_space<vmem>>, vector<8x16xf32>
    %61 = arith.truncf %60 : vector<8x16xf32> to vector<8x16xbf16>
    %c0_31 = arith.constant 0 : index
    %c80 = arith.constant 80 : index
    %62 = vector.load %arg9[%c0_31, %c80] : memref<8x192xf32, #tpu.memory_space<vmem>>, vector<8x16xf32>
    %63 = arith.truncf %62 : vector<8x16xf32> to vector<8x16xbf16>
    %c0_32 = arith.constant 0 : index
    %c144 = arith.constant 144 : index
    %64 = vector.load %arg9[%c0_32, %c144] : memref<8x192xf32, #tpu.memory_space<vmem>>, vector<8x16xf32>
    %65 = arith.truncf %64 : vector<8x16xf32> to vector<8x16xbf16>
    %cst_33 = arith.constant dense<0.000000e+00> : vector<8x8xf32>
    %66 = tpu.matmul %61, %63, %cst_33 {dimension_numbers = #tpu.dot_dimension_numbers<[1], [1], [0], [0], [0, 0, 1, 0], [], []>} : vector<8x16xbf16>, vector<8x16xbf16>, vector<8x8xf32> -> vector<8x8xf32>
    %cst_34 = arith.constant 2.500000e-01 : f32
    %67 = vector.broadcast %cst_34 : f32 to vector<8x8xf32>
    %68 = arith.mulf %66, %67 : vector<8x8xf32>
    %69 = arith.addf %68, %36 : vector<8x8xf32>
    %cst_35 = arith.constant dense<0xFF800000> : vector<8xf32>
    %70 = vector.multi_reduction <maximumf>, %69, %cst_35 [1] : vector<8x8xf32> to vector<8xf32>
    %71 = vector.shape_cast %70 : vector<8xf32> to vector<8x1xf32>
    %72 = vector.broadcast %71 : vector<8x1xf32> to vector<8x8xf32>
    %73 = arith.subf %69, %72 : vector<8x8xf32>
    %74 = math.exp %73 : vector<8x8xf32>
    %cst_36 = arith.constant dense<0.000000e+00> : vector<8xf32>
    %75 = vector.multi_reduction <add>, %74, %cst_36 [1] : vector<8x8xf32> to vector<8xf32>
    %76 = vector.shape_cast %75 : vector<8xf32> to vector<8x1xf32>
    %77 = tpu.reciprocal %76 : vector<8x1xf32> -> vector<8x1xf32>
    %78 = vector.broadcast %77 : vector<8x1xf32> to vector<8x8xf32>
    %79 = arith.mulf %74, %78 : vector<8x8xf32>
    %80 = arith.truncf %79 : vector<8x8xf32> to vector<8x8xbf16>
    %cst_37 = arith.constant dense<0.000000e+00> : vector<8x16xf32>
    %81 = tpu.matmul %80, %65, %cst_37 {dimension_numbers = #tpu.dot_dimension_numbers<[1], [0], [0], [1], [0, 0, 1, 1], [], []>} : vector<8x8xbf16>, vector<8x16xbf16>, vector<8x16xf32> -> vector<8x16xf32>
    %c0_38 = arith.constant 0 : index
    %c16_39 = arith.constant 16 : index
    %82 = vector.load %arg10[%c0_38, %c16_39] : memref<8x64xf32, #tpu.memory_space<vmem>>, vector<8x16xf32>
    tpu.vector_store %arg10[%c0_38, %c16_39], %81 {strides = array<i32>} : memref<8x64xf32, #tpu.memory_space<vmem>>, vector<8x16xf32>,
    %c0_40 = arith.constant 0 : index
    %c32 = arith.constant 32 : index
    %83 = vector.load %arg9[%c0_40, %c32] : memref<8x192xf32, #tpu.memory_space<vmem>>, vector<8x16xf32>
    %84 = arith.truncf %83 : vector<8x16xf32> to vector<8x16xbf16>
    %c0_41 = arith.constant 0 : index
    %c96 = arith.constant 96 : index
    %85 = vector.load %arg9[%c0_41, %c96] : memref<8x192xf32, #tpu.memory_space<vmem>>, vector<8x16xf32>
    %86 = arith.truncf %85 : vector<8x16xf32> to vector<8x16xbf16>
    %c0_42 = arith.constant 0 : index
    %c160 = arith.constant 160 : index
    %87 = vector.load %arg9[%c0_42, %c160] : memref<8x192xf32, #tpu.memory_space<vmem>>, vector<8x16xf32>
    %88 = arith.truncf %87 : vector<8x16xf32> to vector<8x16xbf16>
    %cst_43 = arith.constant dense<0.000000e+00> : vector<8x8xf32>
    %89 = tpu.matmul %84, %86, %cst_43 {dimension_numbers = #tpu.dot_dimension_numbers<[1], [1], [0], [0], [0, 0, 1, 0], [], []>} : vector<8x16xbf16>, vector<8x16xbf16>, vector<8x8xf32> -> vector<8x8xf32>
    %cst_44 = arith.constant 2.500000e-01 : f32
    %90 = vector.broadcast %cst_44 : f32 to vector<8x8xf32>
    %91 = arith.mulf %89, %90 : vector<8x8xf32>
    %92 = arith.addf %91, %36 : vector<8x8xf32>
    %cst_45 = arith.constant dense<0xFF800000> : vector<8xf32>
    %93 = vector.multi_reduction <maximumf>, %92, %cst_45 [1] : vector<8x8xf32> to vector<8xf32>
    %94 = vector.shape_cast %93 : vector<8xf32> to vector<8x1xf32>
    %95 = vector.broadcast %94 : vector<8x1xf32> to vector<8x8xf32>
    %96 = arith.subf %92, %95 : vector<8x8xf32>
    %97 = math.exp %96 : vector<8x8xf32>
    %cst_46 = arith.constant dense<0.000000e+00> : vector<8xf32>
    %98 = vector.multi_reduction <add>, %97, %cst_46 [1] : vector<8x8xf32> to vector<8xf32>
    %99 = vector.shape_cast %98 : vector<8xf32> to vector<8x1xf32>
    %100 = tpu.reciprocal %99 : vector<8x1xf32> -> vector<8x1xf32>
    %101 = vector.broadcast %100 : vector<8x1xf32> to vector<8x8xf32>
    %102 = arith.mulf %97, %101 : vector<8x8xf32>
    %103 = arith.truncf %102 : vector<8x8xf32> to vector<8x8xbf16>
    %cst_47 = arith.constant dense<0.000000e+00> : vector<8x16xf32>
    %104 = tpu.matmul %103, %88, %cst_47 {dimension_numbers = #tpu.dot_dimension_numbers<[1], [0], [0], [1], [0, 0, 1, 1], [], []>} : vector<8x8xbf16>, vector<8x16xbf16>, vector<8x16xf32> -> vector<8x16xf32>
    %c0_48 = arith.constant 0 : index
    %c32_49 = arith.constant 32 : index
    %105 = vector.load %arg10[%c0_48, %c32_49] : memref<8x64xf32, #tpu.memory_space<vmem>>, vector<8x16xf32>
    tpu.vector_store %arg10[%c0_48, %c32_49], %104 {strides = array<i32>} : memref<8x64xf32, #tpu.memory_space<vmem>>, vector<8x16xf32>,
    %c0_50 = arith.constant 0 : index
    %c48 = arith.constant 48 : index
    %106 = vector.load %arg9[%c0_50, %c48] : memref<8x192xf32, #tpu.memory_space<vmem>>, vector<8x16xf32>
    %107 = arith.truncf %106 : vector<8x16xf32> to vector<8x16xbf16>
    %c0_51 = arith.constant 0 : index
    %c112 = arith.constant 112 : index
    %108 = vector.load %arg9[%c0_51, %c112] : memref<8x192xf32, #tpu.memory_space<vmem>>, vector<8x16xf32>
    %109 = arith.truncf %108 : vector<8x16xf32> to vector<8x16xbf16>
    %c0_52 = arith.constant 0 : index
    %c176 = arith.constant 176 : index
    %110 = vector.load %arg9[%c0_52, %c176] : memref<8x192xf32, #tpu.memory_space<vmem>>, vector<8x16xf32>
    %111 = arith.truncf %110 : vector<8x16xf32> to vector<8x16xbf16>
    %cst_53 = arith.constant dense<0.000000e+00> : vector<8x8xf32>
    %112 = tpu.matmul %107, %109, %cst_53 {dimension_numbers = #tpu.dot_dimension_numbers<[1], [1], [0], [0], [0, 0, 1, 0], [], []>} : vector<8x16xbf16>, vector<8x16xbf16>, vector<8x8xf32> -> vector<8x8xf32>
    %cst_54 = arith.constant 2.500000e-01 : f32
    %113 = vector.broadcast %cst_54 : f32 to vector<8x8xf32>
    %114 = arith.mulf %112, %113 : vector<8x8xf32>
    %115 = arith.addf %114, %36 : vector<8x8xf32>
    %cst_55 = arith.constant dense<0xFF800000> : vector<8xf32>
    %116 = vector.multi_reduction <maximumf>, %115, %cst_55 [1] : vector<8x8xf32> to vector<8xf32>
    %117 = vector.shape_cast %116 : vector<8xf32> to vector<8x1xf32>
    %118 = vector.broadcast %117 : vector<8x1xf32> to vector<8x8xf32>
    %119 = arith.subf %115, %118 : vector<8x8xf32>
    %120 = math.exp %119 : vector<8x8xf32>
    %cst_56 = arith.constant dense<0.000000e+00> : vector<8xf32>
    %121 = vector.multi_reduction <add>, %120, %cst_56 [1] : vector<8x8xf32> to vector<8xf32>
    %122 = vector.shape_cast %121 : vector<8xf32> to vector<8x1xf32>
    %123 = tpu.reciprocal %122 : vector<8x1xf32> -> vector<8x1xf32>
    %124 = vector.broadcast %123 : vector<8x1xf32> to vector<8x8xf32>
    %125 = arith.mulf %120, %124 : vector<8x8xf32>
    %126 = arith.truncf %125 : vector<8x8xf32> to vector<8x8xbf16>
    %cst_57 = arith.constant dense<0.000000e+00> : vector<8x16xf32>
    %127 = tpu.matmul %126, %111, %cst_57 {dimension_numbers = #tpu.dot_dimension_numbers<[1], [0], [0], [1], [0, 0, 1, 1], [], []>} : vector<8x8xbf16>, vector<8x16xbf16>, vector<8x16xf32> -> vector<8x16xf32>
    %c0_58 = arith.constant 0 : index
    %c48_59 = arith.constant 48 : index
    %128 = vector.load %arg10[%c0_58, %c48_59] : memref<8x64xf32, #tpu.memory_space<vmem>>, vector<8x16xf32>
    tpu.vector_store %arg10[%c0_58, %c48_59], %127 {strides = array<i32>} : memref<8x64xf32, #tpu.memory_space<vmem>>, vector<8x16xf32>,
    %c0_60 = arith.constant 0 : index
    %c0_61 = arith.constant 0 : index
    %129 = vector.load %arg10[%c0_60, %c0_61] : memref<8x64xf32, #tpu.memory_space<vmem>>, vector<8x64xf32>
    %130 = arith.truncf %129 : vector<8x64xf32> to vector<8x64xbf16>
    %c0_62 = arith.constant 0 : index
    %c0_63 = arith.constant 0 : index
    %131 = vector.load %arg6[%c0_62, %c0_63] : memref<64x64xbf16, #tpu.memory_space<vmem>>, vector<64x64xbf16>
    %cst_64 = arith.constant dense<0.000000e+00> : vector<8x64xf32>
    %132 = tpu.matmul %130, %131, %cst_64 {dimension_numbers = #tpu.dot_dimension_numbers<[1], [0], [0], [1], [0, 0, 1, 1], [], []>} : vector<8x64xbf16>, vector<64x64xbf16>, vector<8x64xf32> -> vector<8x64xf32>
    %c0_65 = arith.constant 0 : index
    %c0_66 = arith.constant 0 : index
    %c0_67 = arith.constant 0 : index
    %133 = vector.load %arg1[%c0_65, %c0_66, %c0_67] : memref<1x8x64xf32, #tpu.memory_space<vmem>>, vector<1x8x64xf32>
    %134 = vector.shape_cast %133 : vector<1x8x64xf32> to vector<8x64xf32>
    %135 = arith.addf %134, %132 : vector<8x64xf32>
    %c0_68 = arith.constant 0 : index
    %c0_69 = arith.constant 0 : index
    %136 = vector.load %arg7[%c0_68, %c0_69] : memref<1x64xf32, #tpu.memory_space<vmem>>, vector<1x64xf32>
    %137 = vector.broadcast %136 : vector<1x64xf32> to vector<8x64xf32>
    %138 = arith.addf %135, %137 : vector<8x64xf32>
    %c0_70 = arith.constant 0 : index
    %c0_71 = arith.constant 0 : index
    %c0_72 = arith.constant 0 : index
    %139 = vector.load %arg8[%c0_70, %c0_71, %c0_72] : memref<1x8x64xf32, #tpu.memory_space<vmem>>, vector<1x8x64xf32>
    %140 = vector.shape_cast %139 : vector<1x8x64xf32> to vector<8x64xf32>
    %141 = vector.shape_cast %138 : vector<8x64xf32> to vector<1x8x64xf32>
    tpu.vector_store %arg8[%c0_70, %c0_71, %c0_72], %141 {strides = array<i32>} : memref<1x8x64xf32, #tpu.memory_space<vmem>>, vector<1x8x64xf32>,
    return
  }
  func.func @transform_0(%arg0: i32) -> (i32, i32, i32) {
    %c0_i32 = arith.constant 0 : i32
    %c0_i32_0 = arith.constant 0 : i32
    %c0_i32_1 = arith.constant 0 : i32
    return %arg0, %c0_i32, %c0_i32_0 : i32, i32, i32
  }
  func.func @transform_1(%arg0: i32) -> (i32, i32) {
    %c0_i32 = arith.constant 0 : i32
    %c0_i32_0 = arith.constant 0 : i32
    %c0_i32_1 = arith.constant 0 : i32
    return %c0_i32, %c0_i32_0 : i32, i32
  }
  func.func @transform_2(%arg0: i32) -> (i32, i32) {
    %c0_i32 = arith.constant 0 : i32
    %c0_i32_0 = arith.constant 0 : i32
    %c0_i32_1 = arith.constant 0 : i32
    return %c0_i32, %c0_i32_0 : i32, i32
  }
  func.func @transform_3(%arg0: i32) -> (i32, i32) {
    %c0_i32 = arith.constant 0 : i32
    %c0_i32_0 = arith.constant 0 : i32
    %c0_i32_1 = arith.constant 0 : i32
    return %c0_i32, %c0_i32_0 : i32, i32
  }
  func.func @transform_4(%arg0: i32) -> (i32, i32) {
    %c0_i32 = arith.constant 0 : i32
    %c0_i32_0 = arith.constant 0 : i32
    %c0_i32_1 = arith.constant 0 : i32
    return %c0_i32, %c0_i32_0 : i32, i32
  }
  func.func @transform_5(%arg0: i32) -> (i32, i32) {
    %c0_i32 = arith.constant 0 : i32
    %c0_i32_0 = arith.constant 0 : i32
    %c0_i32_1 = arith.constant 0 : i32
    return %c0_i32, %c0_i32_0 : i32, i32
  }
  func.func @transform_6(%arg0: i32) -> (i32, i32) {
    %c0_i32 = arith.constant 0 : i32
    %c0_i32_0 = arith.constant 0 : i32
    %c0_i32_1 = arith.constant 0 : i32
    return %c0_i32, %c0_i32_0 : i32, i32
  }
  func.func @transform_7(%arg0: i32) -> (i32, i32, i32) {
    %c0_i32 = arith.constant 0 : i32
    %c0_i32_0 = arith.constant 0 : i32
    %c0_i32_1 = arith.constant 0 : i32
    return %arg0, %c0_i32, %c0_i32_0 : i32, i32, i32
  }
}

module attributes {stable_mosaic.version = 11 : i64} {
  func.func @_layernorm_kernel(%arg0: i32, %arg1: memref<16x64xf32, #tpu.memory_space<vmem>>, %arg2: memref<1x64xf32, #tpu.memory_space<vmem>>, %arg3: memref<1x64xf32, #tpu.memory_space<vmem>>, %arg4: memref<16x64xf32, #tpu.memory_space<vmem>>) attributes {dimension_semantics = [#tpu.dimension_semantics<parallel>], iteration_bounds = array<i64: 1>, scalar_prefetch = 0 : i64, scratch_operands = 0 : i64, tpu.core_type = #tpu.core_type<tc>, window_params = [{transform_indices = @transform_0, window_bounds = array<i64: 16, 64>}, {pipeline_mode = #tpu.pipeline_mode<synchronous>, transform_indices = @transform_1, window_bounds = array<i64: 1, 64>}, {pipeline_mode = #tpu.pipeline_mode<synchronous>, transform_indices = @transform_2, window_bounds = array<i64: 1, 64>}, {transform_indices = @transform_3, window_bounds = array<i64: 16, 64>}]} {
    %c0 = arith.constant 0 : index
    %c0_0 = arith.constant 0 : index
    %0 = vector.load %arg1[%c0, %c0_0] : memref<16x64xf32, #tpu.memory_space<vmem>>, vector<16x64xf32>
    %cst = arith.constant dense<0.000000e+00> : vector<16xf32>
    %1 = vector.multi_reduction <add>, %0, %cst [1] : vector<16x64xf32> to vector<16xf32>
    %2 = vector.shape_cast %1 : vector<16xf32> to vector<16x1xf32>
    %cst_1 = arith.constant 6.400000e+01 : f32
    %3 = vector.broadcast %cst_1 : f32 to vector<16x1xf32>
    %4 = arith.divf %2, %3 : vector<16x1xf32>
    %5 = vector.broadcast %4 : vector<16x1xf32> to vector<16x64xf32>
    %6 = arith.subf %0, %5 : vector<16x64xf32>
    %7 = arith.mulf %6, %6 : vector<16x64xf32>
    %cst_2 = arith.constant dense<0.000000e+00> : vector<16xf32>
    %8 = vector.multi_reduction <add>, %7, %cst_2 [1] : vector<16x64xf32> to vector<16xf32>
    %9 = vector.shape_cast %8 : vector<16xf32> to vector<16x1xf32>
    %cst_3 = arith.constant 6.400000e+01 : f32
    %10 = vector.broadcast %cst_3 : f32 to vector<16x1xf32>
    %11 = arith.divf %9, %10 : vector<16x1xf32>
    %cst_4 = arith.constant 9.99999974E-6 : f32
    %12 = vector.broadcast %cst_4 : f32 to vector<16x1xf32>
    %13 = arith.addf %11, %12 : vector<16x1xf32>
    %14 = math.rsqrt %13 : vector<16x1xf32>
    %15 = vector.broadcast %14 : vector<16x1xf32> to vector<16x64xf32>
    %16 = arith.mulf %6, %15 : vector<16x64xf32>
    %c0_5 = arith.constant 0 : index
    %c0_6 = arith.constant 0 : index
    %17 = vector.load %arg2[%c0_5, %c0_6] : memref<1x64xf32, #tpu.memory_space<vmem>>, vector<1x64xf32>
    %18 = vector.broadcast %17 : vector<1x64xf32> to vector<16x64xf32>
    %19 = arith.mulf %16, %18 : vector<16x64xf32>
    %c0_7 = arith.constant 0 : index
    %c0_8 = arith.constant 0 : index
    %20 = vector.load %arg3[%c0_7, %c0_8] : memref<1x64xf32, #tpu.memory_space<vmem>>, vector<1x64xf32>
    %21 = vector.broadcast %20 : vector<1x64xf32> to vector<16x64xf32>
    %22 = arith.addf %19, %21 : vector<16x64xf32>
    %c0_9 = arith.constant 0 : index
    %c0_10 = arith.constant 0 : index
    %23 = vector.load %arg4[%c0_9, %c0_10] : memref<16x64xf32, #tpu.memory_space<vmem>>, vector<16x64xf32>
    tpu.vector_store %arg4[%c0_9, %c0_10], %22 {strides = array<i32>} : memref<16x64xf32, #tpu.memory_space<vmem>>, vector<16x64xf32>,
    return
  }
  func.func @transform_0(%arg0: i32) -> (i32, i32) {
    %c0_i32 = arith.constant 0 : i32
    %c0_i32_0 = arith.constant 0 : i32
    return %arg0, %c0_i32 : i32, i32
  }
  func.func @transform_1(%arg0: i32) -> (i32, i32) {
    %c0_i32 = arith.constant 0 : i32
    %c0_i32_0 = arith.constant 0 : i32
    %c0_i32_1 = arith.constant 0 : i32
    return %c0_i32, %c0_i32_0 : i32, i32
  }
  func.func @transform_2(%arg0: i32) -> (i32, i32) {
    %c0_i32 = arith.constant 0 : i32
    %c0_i32_0 = arith.constant 0 : i32
    %c0_i32_1 = arith.constant 0 : i32
    return %c0_i32, %c0_i32_0 : i32, i32
  }
  func.func @transform_3(%arg0: i32) -> (i32, i32) {
    %c0_i32 = arith.constant 0 : i32
    %c0_i32_0 = arith.constant 0 : i32
    return %arg0, %c0_i32 : i32, i32
  }
}

</mosaic_0001>

<llo_original>
// kernel: clip_text_forward.9
$region0: #{clip_text_forward.9}
  #allocation0 [shape = 'u32[]', space=smem, size = 0x4, offset = 0x4, fixed_abs, tag = 'smem constant byte address 0x4 - core index']
  #allocation1 [shape = 'u32[144,128]{1,0:T(1,128)}', space=vmem, size = 0x12000, scoped, tag = 'internal scratch']
  %s0 = inlined_call_operand.vmem [shape: f32[16,64], index: 0, kind: input, shape index: {}]
  %s1 = inlined_call_operand.vmem [shape: f32[1,64], index: 1, kind: input, shape index: {}]
  %s2 = inlined_call_operand.vmem [shape: f32[1,64], index: 2, kind: input, shape index: {}]
  %s3 = inlined_call_operand.vmem [shape: f32[16,64], index: 3, kind: output, shape index: {}]
  %s4 = sld [smem:[#allocation0]]
  $region22: #{clip_text_forward.9} parent=0
    _
  %s6 = ssub.s32 1, %s4
  %s7 = scalar_select 0, %s6, %s4
  // Predicated region
  $region2: #{clip_text_forward.9} parent=0 // pred_check
    _
  $region3: #{clip_text_forward.9} parent=0 // pred_check_branch
    %9 = sbr.rel (0) target = $region5
  $region4: #{clip_text_forward.9} parent=0 // pred_region
    _
  $region5: #{clip_text_forward.9} parent=0 // pred_fallthru
    _
  // Predicated region
  $region6: #{clip_text_forward.9} parent=0 // pred_check
    _
  $region7: #{clip_text_forward.9} parent=0 // pred_check_branch
    %11 = sbr.rel (0) target = $region9
  $region8: #{clip_text_forward.9} parent=0 // pred_region
    _
  $region9: #{clip_text_forward.9} parent=0 // pred_fallthru
    _
  // Predicated region
  $region10: #{clip_text_forward.9} parent=0 // pred_check
    _
  $region11: #{clip_text_forward.9} parent=0 // pred_check_branch
    %13 = sbr.rel (0) target = $region13
  $region12: #{clip_text_forward.9} parent=0 // pred_region
    _
  $region13: #{clip_text_forward.9} parent=0 // pred_fallthru
    _
  %v14 = vld [vmem:[%s0] sm:$0xff]
  %v15 = vld [vmem:[%s0 + $0x8] sm:$0xff]
  %vm16 = vcmask 523264
  %v17 = vsel %vm16, %v14, 0.0
  %18 = vadd.xlane.f32.xlu0 %v17
  %v19 = vpop.xlane.xlu0 %18
  %v20 = vsel %vm16, %v15, 0.0
  %21 = vadd.xlane.f32.xlu0 %v20
  %v22 = vpop.xlane.xlu0 %21
  %v23 = vrcp.pop 64.0
  %v24 = vmul.f32 %v19, %v23
  %v25 = vmul.f32 %v22, %v23
  %v26 = vsub.f32 %v14, %v24
  %v27 = vsub.f32 %v15, %v25
  %v28 = vmul.f32 %v26, %v26
  %v29 = vmul.f32 %v27, %v27
  %v30 = vsel %vm16, %v28, 0.0
  %31 = vadd.xlane.f32.xlu0 %v30
  %v32 = vpop.xlane.xlu0 %31
  %v33 = vsel %vm16, %v29, 0.0
  %34 = vadd.xlane.f32.xlu0 %v33
  %v35 = vpop.xlane.xlu0 %34
  %v36 = vmul.f32 %v32, %v23
  %v37 = vmul.f32 %v35, %v23
  %v38 = vadd.f32 %v36, 1e-05
  %v39 = vadd.f32 %v37, 1e-05
  %v40 = vrsqrt.pop %v38
  %v41 = vrsqrt.pop %v39
  %v42 = vmul.f32 %v26, %v40
  %v43 = vmul.f32 %v27, %v41
  %v44 = vld [vmem:[%s1] sm:$0x1]
  %v46 = vlaneseq
  %v47 = vshrl.u32 %v46, 7
  %v48 = vsub.s32 0, %v47
  %v49 = vrot.slane %v44, %v48
  %v51 = vmul.f32 %v42, %v49
  %v52 = vmul.f32 %v43, %v49
  %v53 = vld [vmem:[%s2] sm:$0x1]
  %v55 = vlaneseq
  %v56 = vshrl.u32 %v55, 7
  %v57 = vsub.s32 0, %v56
  %v58 = vrot.slane %v53, %v57
  %v60 = vadd.f32 %v51, %v58
  %v61 = vadd.f32 %v52, %v58
  %62 = vst.msk [vmem:[%s3] sm:$0xff] %vm16, %v60
  %63 = vst.msk [vmem:[%s3 + $0x8] sm:$0xff] %vm16, %v61
  // Predicated region
  $region14: #{clip_text_forward.9} parent=0 // pred_check
    _
  $region15: #{clip_text_forward.9} parent=0 // pred_check_branch
    %65 = sbr.rel (0) target = $region17
  $region16: #{clip_text_forward.9} parent=0 // pred_region
    _
  $region17: #{clip_text_forward.9} parent=0 // pred_fallthru
    _
  // Predicated region
  $region18: #{clip_text_forward.9} parent=0 // pred_check
    _
  $region19: #{clip_text_forward.9} parent=0 // pred_check_branch
    %67 = sbr.rel (0) target = $region21
  $region20: #{clip_text_forward.9} parent=0 // pred_region
    _
  $region21: #{clip_text_forward.9} parent=0 // pred_fallthru
    _

// kernel: clip_text_forward.6
$region0: #{clip_text_forward.6}
  #allocation0 [shape = 'u32[]', space=smem, size = 0x4, offset = 0x4, fixed_abs, tag = 'smem constant byte address 0x4 - core index']
  #allocation1 [shape = 'u32[144,128]{1,0:T(1,128)}', space=vmem, size = 0x12000, scoped, tag = 'internal scratch']
  #allocation2 [shape = 'f32[16,64]{1,0:T(8,128)}', space=vmem, size = 0x2000, scoped, tag = 'scratch operand']
  #allocation3 [shape = 'bf16[16,64]{1,0:T(8,128)(2,1)}', space=vmem, size = 0x1000, scoped, tag = 'scratch operand']
  %s0 = inlined_call_operand.vmem [shape: f32[16,64], index: 0, kind: input, shape index: {}]
  %s1 = inlined_call_operand.vmem [shape: f32[1,64], index: 1, kind: input, shape index: {}]
  %s2 = inlined_call_operand.vmem [shape: f32[1,64], index: 2, kind: input, shape index: {}]
  %s3 = inlined_call_operand.vmem [shape: bf16[64,256], index: 3, kind: input, shape index: {}]
  %s4 = inlined_call_operand.vmem [shape: f32[1,256], index: 4, kind: input, shape index: {}]
  %s5 = inlined_call_operand.vmem [shape: bf16[256,64], index: 5, kind: input, shape index: {}]
  %s6 = inlined_call_operand.vmem [shape: f32[1,64], index: 6, kind: input, shape index: {}]
  %s7 = inlined_call_operand.vmem [shape: f32[16,64], index: 7, kind: output, shape index: {}]
  %s8 = sld [smem:[#allocation0]]
  $region46: #{clip_text_forward.6} parent=0
    _
  %s10 = ssub.s32 1, %s8
  %s11 = scalar_select 0, %s10, %s8
  // Predicated region
  $region2: #{clip_text_forward.6} parent=0 // pred_check
    _
  $region3: #{clip_text_forward.6} parent=0 // pred_check_branch
    %13 = sbr.rel (0) target = $region5
  $region4: #{clip_text_forward.6} parent=0 // pred_region
    _
  $region5: #{clip_text_forward.6} parent=0 // pred_fallthru
    _
  // Predicated region
  $region6: #{clip_text_forward.6} parent=0 // pred_check
    _
  $region7: #{clip_text_forward.6} parent=0 // pred_check_branch
    %15 = sbr.rel (0) target = $region9
  $region8: #{clip_text_forward.6} parent=0 // pred_region
    _
  $region9: #{clip_text_forward.6} parent=0 // pred_fallthru
    _
  // Predicated region
  $region10: #{clip_text_forward.6} parent=0 // pred_check
    _
  $region11: #{clip_text_forward.6} parent=0 // pred_check_branch
    %17 = sbr.rel (0) target = $region13
  $region12: #{clip_text_forward.6} parent=0 // pred_region
    _
  $region13: #{clip_text_forward.6} parent=0 // pred_fallthru
    _
  // Predicated region
  $region14: #{clip_text_forward.6} parent=0 // pred_check
    _
  $region15: #{clip_text_forward.6} parent=0 // pred_check_branch
    %19 = sbr.rel (0) target = $region17
  $region16: #{clip_text_forward.6} parent=0 // pred_region
    _
  $region17: #{clip_text_forward.6} parent=0 // pred_fallthru
    _
  // Predicated region
  $region18: #{clip_text_forward.6} parent=0 // pred_check
    _
  $region19: #{clip_text_forward.6} parent=0 // pred_check_branch
    %21 = sbr.rel (0) target = $region21
  $region20: #{clip_text_forward.6} parent=0 // pred_region
    _
  $region21: #{clip_text_forward.6} parent=0 // pred_fallthru
    _
  // Predicated region
  $region22: #{clip_text_forward.6} parent=0 // pred_check
    _
  $region23: #{clip_text_forward.6} parent=0 // pred_check_branch
    %23 = sbr.rel (0) target = $region25
  $region24: #{clip_text_forward.6} parent=0 // pred_region
    _
  $region25: #{clip_text_forward.6} parent=0 // pred_fallthru
    _
  // Predicated region
  $region26: #{clip_text_forward.6} parent=0 // pred_check
    _
  $region27: #{clip_text_forward.6} parent=0 // pred_check_branch
    %25 = sbr.rel (0) target = $region29
  $region28: #{clip_text_forward.6} parent=0 // pred_region
    _
  $region29: #{clip_text_forward.6} parent=0 // pred_fallthru
    _
  %p27 = scmp.eq.s32.totalorder 0, 0
  // Predicated region
  $region30: #{clip_text_forward.6} parent=0 // pred_check
    %p28 = pneg %p27
  $region31: #{clip_text_forward.6} parent=0 // pred_check_branch
    %30 = sbr.rel (%p28) target = $region33
  $region32: #{clip_text_forward.6} parent=0 // pred_region
    %v31 = vld [vmem:[%s0] sm:$0xff]
    %v32 = vld [vmem:[%s0 + $0x8] sm:$0xff]
    %vm33 = vcmask 523264
    %v34 = vsel %vm33, %v31, 0.0
    %35 = vadd.xlane.f32.xlu0 %v34
    %v36 = vpop.xlane.xlu0 %35
    %v37 = vsel %vm33, %v32, 0.0
    %38 = vadd.xlane.f32.xlu0 %v37
    %v39 = vpop.xlane.xlu0 %38
    %v40 = vrcp.pop 64.0
    %v41 = vmul.f32 %v36, %v40
    %v42 = vmul.f32 %v39, %v40
    %v43 = vsub.f32 %v31, %v41
    %v44 = vsub.f32 %v32, %v42
    %v45 = vmul.f32 %v43, %v43
    %v46 = vmul.f32 %v44, %v44
    %v47 = vsel %vm33, %v45, 0.0
    %48 = vadd.xlane.f32.xlu0 %v47
    %v49 = vpop.xlane.xlu0 %48
    %v50 = vsel %vm33, %v46, 0.0
    %51 = vadd.xlane.f32.xlu0 %v50
    %v52 = vpop.xlane.xlu0 %51
    %v53 = vmul.f32 %v49, %v40
    %v54 = vmul.f32 %v52, %v40
    %v55 = vadd.f32 %v53, 1e-05
    %v56 = vadd.f32 %v54, 1e-05
    %v57 = vrsqrt.pop %v55
    %v58 = vrsqrt.pop %v56
    %v59 = vmul.f32 %v43, %v57
    %v60 = vmul.f32 %v44, %v58
    %v61 = vld [vmem:[%s1] sm:$0x1]
    %v63 = vlaneseq
    %v64 = vshrl.u32 %v63, 7
    %v65 = vsub.s32 0, %v64
    %v66 = vrot.slane %v61, %v65
    %v68 = vmul.f32 %v59, %v66
    %v69 = vmul.f32 %v60, %v66
    %v70 = vld [vmem:[%s2] sm:$0x1]
    %v72 = vlaneseq
    %v73 = vshrl.u32 %v72, 7
    %v74 = vsub.s32 0, %v73
    %v75 = vrot.slane %v70, %v74
    %v77 = vadd.f32 %v68, %v75
    %v78 = vadd.f32 %v69, %v75
    %v79 = vpack.c.bf16 %v78, %v77
    %v81 = vunpack.c.l.b16 %v79
    %v82 = vunpack.c.h.b16 %v79
    %v83 = vpack.c.b16 %v81, %v81
    %v84 = vpack.c.b16 %v82, %v82
    %vm87 = vcmask 519168
    %88 = vst.msk [vmem:[#allocation3] sm:$0xf] %vm87, %v83
    %89 = vst.msk [vmem:[#allocation3 + $0x4] sm:$0xf] %vm87, %v84
    %v90 = vld [vmem:[%s0] sm:$0xff]
    %v91 = vld [vmem:[%s0 + $0x8] sm:$0xff]
    %v92 = vld [vmem:[%s6] sm:$0x1]
    %v94 = vlaneseq
    %v95 = vshrl.u32 %v94, 7
    %v96 = vsub.s32 0, %v95
    %v97 = vrot.slane %v92, %v96
    %v99 = vadd.f32 %v90, %v97
    %v100 = vadd.f32 %v91, %v97
    %101 = vst.msk [vmem:[#allocation2] sm:$0xff] %vm33, %v99
    %102 = vst.msk [vmem:[#allocation2 + $0x8] sm:$0xff] %vm33, %v100
  $region33: #{clip_text_forward.6} parent=0 // pred_fallthru
    _
  %v103 = vld [vmem:[#allocation3] sm:$0xf]
  %v104 = vld [vmem:[#allocation3 + $0x4] sm:$0xf]
  %v105 = vld [vmem:[%s3] sm:$0xff]
  %v106 = vld [vmem:[%s3 + $0x8] sm:$0xff]
  %v107 = vld [vmem:[%s3 + $0x10] sm:$0xff]
  %v108 = vld [vmem:[%s3 + $0x18] sm:$0xff]
  %v109 = vld [vmem:[%s3 + $0x20] sm:$0xff]
  %v110 = vld [vmem:[%s3 + $0x28] sm:$0xff]
  %v111 = vld [vmem:[%s3 + $0x30] sm:$0xff]
  %v112 = vld [vmem:[%s3 + $0x38] sm:$0xff]
  %v113 = vld [vmem:[%s4] sm:$0x3]
  %v115 = vlaneseq
  %v116 = vshrl.u32 %v115, 7
  %v117 = vsub.s32 0, %v116
  %v118 = vrot.slane %v113, %v117
  %v119 = vlaneseq
  %v120 = vshrl.u32 %v119, 7
  %v121 = vsub.s32 1, %v120
  %v122 = vrot.slane %v113, %v121
  %v127 = vunpack.c.l.b16 %v103
  %v128 = vunpack.c.l.b16 %v104
  %v129 = vpack.c.b16 %v128, %v127
  %v138 = vunpack.c.l.b16 %v105
  %v139 = vunpack.c.h.b16 %v105
  %v140 = vunpack.c.l.b16 %v106
  %v141 = vunpack.c.h.b16 %v106
  %v142 = vunpack.c.l.b16 %v107
  %v143 = vunpack.c.h.b16 %v107
  %v144 = vunpack.c.l.b16 %v108
  %v145 = vunpack.c.h.b16 %v108
  %v146 = vunpack.c.l.b16 %v109
  %v147 = vunpack.c.h.b16 %v109
  %v148 = vunpack.c.l.b16 %v110
  %v149 = vunpack.c.h.b16 %v110
  %v150 = vunpack.c.l.b16 %v111
  %v151 = vunpack.c.h.b16 %v111
  %v152 = vunpack.c.l.b16 %v112
  %v153 = vunpack.c.h.b16 %v112
  %v154 = vpack.c.b16 %v140, %v138
  %v155 = vpack.c.b16 %v141, %v139
  %v156 = vpack.c.b16 %v144, %v142
  %v157 = vpack.c.b16 %v145, %v143
  %v158 = vpack.c.b16 %v148, %v146
  %v159 = vpack.c.b16 %v149, %v147
  %v160 = vpack.c.b16 %v152, %v150
  %v161 = vpack.c.b16 %v153, %v151
  %vm170 = vcmask 523264
  %v172 = vsel %vm170, %v129, 0
  %174 = vmatprep.subr.bf16.mxu0 0
  %175 = vmatpush1.bf16.msra.mxu0 0
  %176 = vmatprep.subr.bf16.mxu0 0
  %177 = vmatpush1.bf16.msra.mxu0 0
  %178 = vmatprep.subr.bf16.mxu0 0
  %179 = vmatpush1.bf16.msra.mxu0 0
  %180 = vmatprep.subr.bf16.mxu0 0
  %181 = vmatpush1.bf16.msra.mxu0 0
  %182 = vmatprep.subr.bf16.mxu0 %v161
  %183 = vmatpush1.bf16.msra.mxu0 %v160
  %184 = vmatprep.subr.bf16.mxu0 %v159
  %185 = vmatpush1.bf16.msra.mxu0 %v158
  %186 = vmatprep.subr.bf16.mxu0 %v157
  %187 = vmatpush1.bf16.msra.mxu0 %v156
  %188 = vmatprep.subr.bf16.mxu0 %v155
  %189 = vmatpush1.bf16.msra.mxu0 %v154
  %190 = vmatprep.subr.bf16.mxu0 0
  %191 = vmatpush2.bf16.msra.mxu0 0
  %192 = vmatprep.subr.bf16.mxu0 0
  %193 = vmatpush2.bf16.msra.mxu0 0
  %194 = vmatprep.subr.bf16.mxu0 0
  %195 = vmatpush2.bf16.msra.mxu0 0
  %196 = vmatprep.subr.bf16.mxu0 0
  %197 = vmatpush2.bf16.msra.mxu0 0
  %198 = vmatprep.subr.bf16.mxu0 0
  %199 = vmatpush2.bf16.msra.mxu0 0
  %200 = vmatprep.subr.bf16.mxu0 0
  %201 = vmatpush2.bf16.msra.mxu0 0
  %202 = vmatprep.subr.bf16.mxu0 0
  %203 = vmatpush2.bf16.msra.mxu0 0
  %204 = vmatprep.subr.bf16.mxu0 0
  %205 = vmatpush2.bf16.msra.mxu0 0
  %206 = vmatprep.mubr.bf16.mxu0 0
  %207 = vmatmul.mubr.bf16.gmra.mxu0 %v172
  %v208 = vpop.f32.mrf.mxu0
  %v209 = vadd.f32 %v118, %v208
  %v210 = vpop.f32.mrf.mxu0
  %v211 = vadd.f32 %v122, %v210
  %v212 = vpop.f32.mrf.mxu0
  %v213 = vadd.f32 %v118, %v212
  %v214 = vpop.f32.mrf.mxu0
  %v215 = vadd.f32 %v122, %v214
  %216 = vdwg.mxu0
  %v217 = vmul.f32 %v209, 1.702
  %v218 = vmul.f32 %v211, 1.702
  %v219 = vmul.f32 %v213, 1.702
  %v220 = vmul.f32 %v215, 1.702
  %v221 = vxor.u32 %v217, 2147483648
  %v222 = vxor.u32 %v218, 2147483648
  %v223 = vxor.u32 %v219, 2147483648
  %v224 = vxor.u32 %v220, 2147483648
  %v225 = vmul.f32 %v221, 1.442695
  %v226 = vpow.pop %v225
  %v227 = vmul.f32 %v222, 1.442695
  %v228 = vpow.pop %v227
  %v229 = vmul.f32 %v223, 1.442695
  %v230 = vpow.pop %v229
  %v231 = vmul.f32 %v224, 1.442695
  %v232 = vpow.pop %v231
  %v233 = vadd.f32 %v226, 1.0
  %v234 = vadd.f32 %v228, 1.0
  %v235 = vadd.f32 %v230, 1.0
  %v236 = vadd.f32 %v232, 1.0
  %v237 = vrcp.pop %v233
  %v238 = vmul.f32 1.0, %v237
  %v239 = vrcp.pop %v234
  %v240 = vmul.f32 1.0, %v239
  %v241 = vrcp.pop %v235
  %v242 = vmul.f32 1.0, %v241
  %v243 = vrcp.pop %v236
  %v244 = vmul.f32 1.0, %v243
  %v245 = vmul.f32 %v209, %v238
  %v246 = vmul.f32 %v211, %v240
  %v247 = vmul.f32 %v213, %v242
  %v248 = vmul.f32 %v215, %v244
  %v249 = vld [vmem:[#allocation2] sm:$0xff]
  %v250 = vld [vmem:[#allocation2 + $0x8] sm:$0xff]
  %v251 = vpack.c.bf16 %v247, %v245
  %v252 = vpack.c.bf16 %v248, %v246
  %v253 = vld [vmem:[%s5] sm:$0xf]
  %v254 = vld [vmem:[%s5 + $0x4] sm:$0xf]
  %v255 = vld [vmem:[%s5 + $0x8] sm:$0xf]
  %v256 = vld [vmem:[%s5 + $0xc] sm:$0xf]
  %v257 = vld [vmem:[%s5 + $0x10] sm:$0xf]
  %v258 = vld [vmem:[%s5 + $0x14] sm:$0xf]
  %v259 = vld [vmem:[%s5 + $0x18] sm:$0xf]
  %v260 = vld [vmem:[%s5 + $0x1c] sm:$0xf]
  %v261 = vld [vmem:[%s5 + $0x20] sm:$0xf]
  %v262 = vld [vmem:[%s5 + $0x24] sm:$0xf]
  %v263 = vld [vmem:[%s5 + $0x28] sm:$0xf]
  %v264 = vld [vmem:[%s5 + $0x2c] sm:$0xf]
  %v265 = vld [vmem:[%s5 + $0x30] sm:$0xf]
  %v266 = vld [vmem:[%s5 + $0x34] sm:$0xf]
  %v267 = vld [vmem:[%s5 + $0x38] sm:$0xf]
  %v268 = vld [vmem:[%s5 + $0x3c] sm:$0xf]
  %v269 = vld [vmem:[%s5 + $0x40] sm:$0xf]
  %v270 = vld [vmem:[%s5 + $0x44] sm:$0xf]
  %v271 = vld [vmem:[%s5 + $0x48] sm:$0xf]
  %v272 = vld [vmem:[%s5 + $0x4c] sm:$0xf]
  %v273 = vld [vmem:[%s5 + $0x50] sm:$0xf]
  %v274 = vld [vmem:[%s5 + $0x54] sm:$0xf]
  %v275 = vld [vmem:[%s5 + $0x58] sm:$0xf]
  %v276 = vld [vmem:[%s5 + $0x5c] sm:$0xf]
  %v277 = vld [vmem:[%s5 + $0x60] sm:$0xf]
  %v278 = vld [vmem:[%s5 + $0x64] sm:$0xf]
  %v279 = vld [vmem:[%s5 + $0x68] sm:$0xf]
  %v280 = vld [vmem:[%s5 + $0x6c] sm:$0xf]
  %v281 = vld [vmem:[%s5 + $0x70] sm:$0xf]
  %v282 = vld [vmem:[%s5 + $0x74] sm:$0xf]
  %v283 = vld [vmem:[%s5 + $0x78] sm:$0xf]
  %v284 = vld [vmem:[%s5 + $0x7c] sm:$0xf]
  %v317 = vunpack.c.l.b16 %v253
  %v318 = vunpack.c.l.b16 %v254
  %v319 = vunpack.c.l.b16 %v255
  %v320 = vunpack.c.l.b16 %v256
  %v321 = vunpack.c.l.b16 %v257
  %v322 = vunpack.c.l.b16 %v258
  %v323 = vunpack.c.l.b16 %v259
  %v324 = vunpack.c.l.b16 %v260
  %v325 = vunpack.c.l.b16 %v261
  %v326 = vunpack.c.l.b16 %v262
  %v327 = vunpack.c.l.b16 %v263
  %v328 = vunpack.c.l.b16 %v264
  %v329 = vunpack.c.l.b16 %v265
  %v330 = vunpack.c.l.b16 %v266
  %v331 = vunpack.c.l.b16 %v267
  %v332 = vunpack.c.l.b16 %v268
  %v333 = vunpack.c.l.b16 %v269
  %v334 = vunpack.c.l.b16 %v270
  %v335 = vunpack.c.l.b16 %v271
  %v336 = vunpack.c.l.b16 %v272
  %v337 = vunpack.c.l.b16 %v273
  %v338 = vunpack.c.l.b16 %v274
  %v339 = vunpack.c.l.b16 %v275
  %v340 = vunpack.c.l.b16 %v276
  %v341 = vunpack.c.l.b16 %v277
  %v342 = vunpack.c.l.b16 %v278
  %v343 = vunpack.c.l.b16 %v279
  %v344 = vunpack.c.l.b16 %v280
  %v345 = vunpack.c.l.b16 %v281
  %v346 = vunpack.c.l.b16 %v282
  %v347 = vunpack.c.l.b16 %v283
  %v348 = vunpack.c.l.b16 %v284
  %v349 = vpack.c.b16 %v318, %v317
  %v350 = vpack.c.b16 %v320, %v319
  %v351 = vpack.c.b16 %v322, %v321
  %v352 = vpack.c.b16 %v324, %v323
  %v353 = vpack.c.b16 %v326, %v325
  %v354 = vpack.c.b16 %v328, %v327
  %v355 = vpack.c.b16 %v330, %v329
  %v356 = vpack.c.b16 %v332, %v331
  %v357 = vpack.c.b16 %v334, %v333
  %v358 = vpack.c.b16 %v336, %v335
  %v359 = vpack.c.b16 %v338, %v337
  %v360 = vpack.c.b16 %v340, %v339
  %v361 = vpack.c.b16 %v342, %v341
  %v362 = vpack.c.b16 %v344, %v343
  %v363 = vpack.c.b16 %v346, %v345
  %v364 = vpack.c.b16 %v348, %v347
  %381 = vmatprep.subr.bf16.mxu0 0
  %382 = vmatpush1.bf16.msra.mxu0 %v356
  %383 = vmatprep.subr.bf16.mxu0 0
  %384 = vmatpush1.bf16.msra.mxu0 %v355
  %385 = vmatprep.subr.bf16.mxu0 0
  %386 = vmatpush1.bf16.msra.mxu0 %v354
  %387 = vmatprep.subr.bf16.mxu0 0
  %388 = vmatpush1.bf16.msra.mxu0 %v353
  %389 = vmatprep.subr.bf16.mxu0 0
  %390 = vmatpush1.bf16.msra.mxu0 %v352
  %391 = vmatprep.subr.bf16.mxu0 0
  %392 = vmatpush1.bf16.msra.mxu0 %v351
  %393 = vmatprep.subr.bf16.mxu0 0
  %394 = vmatpush1.bf16.msra.mxu0 %v350
  %395 = vmatprep.subr.bf16.mxu0 0
  %396 = vmatpush1.bf16.msra.mxu0 %v349
  %397 = vmatprep.subr.bf16.mxu0 0
  %398 = vmatpush2.bf16.msra.mxu0 %v364
  %399 = vmatprep.subr.bf16.mxu0 0
  %400 = vmatpush2.bf16.msra.mxu0 %v363
  %401 = vmatprep.subr.bf16.mxu0 0
  %402 = vmatpush2.bf16.msra.mxu0 %v362
  %403 = vmatprep.subr.bf16.mxu0 0
  %404 = vmatpush2.bf16.msra.mxu0 %v361
  %405 = vmatprep.subr.bf16.mxu0 0
  %406 = vmatpush2.bf16.msra.mxu0 %v360
  %407 = vmatprep.subr.bf16.mxu0 0
  %408 = vmatpush2.bf16.msra.mxu0 %v359
  %409 = vmatprep.subr.bf16.mxu0 0
  %410 = vmatpush2.bf16.msra.mxu0 %v358
  %411 = vmatprep.subr.bf16.mxu0 0
  %412 = vmatpush2.bf16.msra.mxu0 %v357
  %413 = vmatprep.mubr.bf16.mxu0 %v252
  %414 = vmatmul.mubr.bf16.gmra.mxu0 %v251
  %v415 = vpop.f32.mrf.mxu0
  %v416 = vadd.f32 0.0, %v415
  %v417 = vpop.f32.mrf.mxu0
  %v418 = vpop.f32.mrf.mxu0
  %v419 = vadd.f32 0.0, %v418
  %v420 = vpop.f32.mrf.mxu0
  %421 = vdwg.mxu0
  %v422 = vadd.f32 %v249, %v416
  %v423 = vadd.f32 %v250, %v419
  %424 = vst.msk [vmem:[#allocation2] sm:$0xff] %vm170, %v422
  %425 = vst.msk [vmem:[#allocation2 + $0x8] sm:$0xff] %vm170, %v423
  // Predicated region
  $region34: #{clip_text_forward.6} parent=0 // pred_check
    %p426 = pneg %p27
  $region35: #{clip_text_forward.6} parent=0 // pred_check_branch
    %428 = sbr.rel (%p426) target = $region37
  $region36: #{clip_text_forward.6} parent=0 // pred_region
    %v429 = vld [vmem:[#allocation2] sm:$0xff]
    %v430 = vld [vmem:[#allocation2 + $0x8] sm:$0xff]
    %431 = vst.msk [vmem:[%s7] sm:$0xff] %vm170, %v429
    %432 = vst.msk [vmem:[%s7 + $0x8] sm:$0xff] %vm170, %v430
  $region37: #{clip_text_forward.6} parent=0 // pred_fallthru
    _
  // Predicated region
  $region38: #{clip_text_forward.6} parent=0 // pred_check
    _
  $region39: #{clip_text_forward.6} parent=0 // pred_check_branch
    %434 = sbr.rel (0) target = $region41
  $region40: #{clip_text_forward.6} parent=0 // pred_region
    _
  $region41: #{clip_text_forward.6} parent=0 // pred_fallthru
    _
  // Predicated region
  $region42: #{clip_text_forward.6} parent=0 // pred_check
    _
  $region43: #{clip_text_forward.6} parent=0 // pred_check_branch
    %436 = sbr.rel (0) target = $region45
  $region44: #{clip_text_forward.6} parent=0 // pred_region
    _
  $region45: #{clip_text_forward.6} parent=0 // pred_fallthru
    _

// kernel: clip_text_forward.5
$region0: #{clip_text_forward.5}
  #allocation0 [shape = 'u32[]', space=smem, size = 0x4, offset = 0x4, fixed_abs, tag = 'smem constant byte address 0x4 - core index']
  #allocation1 [shape = 'u32[144,128]{1,0:T(1,128)}', space=vmem, size = 0x12000, scoped, tag = 'internal scratch']
  #allocation2 [shape = 'f32[8,192]{1,0:T(8,128)}', space=vmem, size = 0x2000, scoped, tag = 'scratch operand']
  #allocation3 [shape = 'f32[8,64]{1,0:T(8,128)}', space=vmem, size = 0x1000, scoped, tag = 'scratch operand']
  %s0 = inlined_call_operand.vmem [shape: f32[2,8,64], index: 0, kind: input, shape index: {}]
  %s1 = inlined_call_operand.vmem [shape: f32[1,64], index: 1, kind: input, shape index: {}]
  %s2 = inlined_call_operand.vmem [shape: f32[1,64], index: 2, kind: input, shape index: {}]
  %s3 = inlined_call_operand.vmem [shape: bf16[64,192], index: 3, kind: input, shape index: {}]
  %s4 = inlined_call_operand.vmem [shape: f32[1,192], index: 4, kind: input, shape index: {}]
  %s5 = inlined_call_operand.vmem [shape: bf16[64,64], index: 5, kind: input, shape index: {}]
  %s6 = inlined_call_operand.vmem [shape: f32[1,64], index: 6, kind: input, shape index: {}]
  %s7 = inlined_call_operand.vmem [shape: f32[2,8,64], index: 7, kind: output, shape index: {}]
  %s8 = sld [smem:[#allocation0]]
  $region61: #{clip_text_forward.5} parent=0
    _
  %s10 = ssub.s32 1, %s8
  %s11 = scalar_select 0, %s10, %s8
  loop: start=0, step=1, limit=4
  $region2: #{clip_text_forward.5} parent=0 // loop_pre_header
    _
  $region3: #{clip_text_forward.5} parent=0 // loop_header
    %s13 = sphi 0, %s17
    %p14 = scmp.ge.s32.totalorder %s13, 4
    %s23 = sphi 0, %s25
    %s26 = sphi 0, %s23
    %s27 = sphi 0, %s26
    %s43 = sphi 0, %s27
    %s47 = sphi 0, %s47
    %s49 = sphi 0, %s47
    %s50 = sphi 0, %s49
    %s64 = sphi 0, %s50
    %s68 = sphi 0, %s68
    %s70 = sphi 0, %s68
    %s71 = sphi 0, %s70
    %s85 = sphi 0, %s71
    %s89 = sphi 0, %s89
    %s91 = sphi 0, %s89
    %s92 = sphi 0, %s91
    %s106 = sphi 0, %s92
    %s110 = sphi 0, %s110
    %s112 = sphi 0, %s110
    %s113 = sphi 0, %s112
    %s127 = sphi 0, %s113
    %s131 = sphi 0, %s131
    %s133 = sphi 0, %s131
    %s134 = sphi 0, %s133
    %s148 = sphi 0, %s134
    %s152 = sphi 0, %s152
    %s154 = sphi 0, %s152
    %s155 = sphi 0, %s154
    %s169 = sphi 0, %s155
    %s175 = sphi 0, %s177
    %s178 = sphi 0, %s175
    %s179 = sphi 0, %s178
    %s195 = sphi 0, %s179
  $region4: #{clip_text_forward.5} parent=0 // loop_header_branch
    %16 = sbr.rel (%p14) target = $region8
  $region5: #{clip_text_forward.5} parent=0 // loop_body
    %s18 = ssub.s32 %s13, 1
    %s19 = ssub.s32 %s13, 2
    %s20 = sadd.s32 %s13, 1
    %s21 = ssub.s32 %s13, %s20
    %p22 = scmp.eq.s32.totalorder %s21, 0
    %s24 = sadd.s32 %s23, 1
    %s25 = scalar_select %p22, %s23, %s24
    %p28 = pneg %p22
    %p29 = scmp.eq.s32.totalorder %s13, 1
    %p30 = por %p28, %p29
    %p31 = scmp.ne.s32.totalorder %s23, %s26
    %p32 = scmp.eq.s32.totalorder %s13, 0
    %p33 = por %p31, %p32
    %p34 = scmp.ne.s32.totalorder %s23, %s26
    %p35 = scmp.eq.s32.totalorder %s18, 1
    %p36 = por %p34, %p35
    %p37 = scmp.ne.s32.totalorder %s26, %s27
    %p38 = scmp.eq.s32.totalorder %s18, 0
    %p39 = por %p37, %p38
    %p40 = scmp.ne.s32.totalorder %s26, %s27
    %p41 = scmp.eq.s32.totalorder %s19, 1
    %p42 = por %p40, %p41
    %p44 = scmp.ne.s32.totalorder %s27, %s43
    %p45 = scmp.eq.s32.totalorder %s19, 0
    %p46 = por %p44, %p45
    %s48 = sadd.s32 %s47, 1
    %p51 = scmp.eq.s32.totalorder %s13, 1
    %p52 = scmp.ne.s32.totalorder %s47, %s49
    %p53 = scmp.eq.s32.totalorder %s13, 0
    %p54 = por %p52, %p53
    %p55 = scmp.ne.s32.totalorder %s47, %s49
    %p56 = scmp.eq.s32.totalorder %s18, 1
    %p57 = por %p55, %p56
    %p58 = scmp.ne.s32.totalorder %s49, %s50
    %p59 = scmp.eq.s32.totalorder %s18, 0
    %p60 = por %p58, %p59
    %p61 = scmp.ne.s32.totalorder %s49, %s50
    %p62 = scmp.eq.s32.totalorder %s19, 1
    %p63 = por %p61, %p62
    %p65 = scmp.ne.s32.totalorder %s50, %s64
    %p66 = scmp.eq.s32.totalorder %s19, 0
    %p67 = por %p65, %p66
    %s69 = sadd.s32 %s68, 1
    %p72 = scmp.eq.s32.totalorder %s13, 1
    %p73 = scmp.ne.s32.totalorder %s68, %s70
    %p74 = scmp.eq.s32.totalorder %s13, 0
    %p75 = por %p73, %p74
    %p76 = scmp.ne.s32.totalorder %s68, %s70
    %p77 = scmp.eq.s32.totalorder %s18, 1
    %p78 = por %p76, %p77
    %p79 = scmp.ne.s32.totalorder %s70, %s71
    %p80 = scmp.eq.s32.totalorder %s18, 0
    %p81 = por %p79, %p80
    %p82 = scmp.ne.s32.totalorder %s70, %s71
    %p83 = scmp.eq.s32.totalorder %s19, 1
    %p84 = por %p82, %p83
    %p86 = scmp.ne.s32.totalorder %s71, %s85
    %p87 = scmp.eq.s32.totalorder %s19, 0
    %p88 = por %p86, %p87
    %s90 = sadd.s32 %s89, 1
    %p93 = scmp.eq.s32.totalorder %s13, 1
    %p94 = scmp.ne.s32.totalorder %s89, %s91
    %p95 = scmp.eq.s32.totalorder %s13, 0
    %p96 = por %p94, %p95
    %p97 = scmp.ne.s32.totalorder %s89, %s91
    %p98 = scmp.eq.s32.totalorder %s18, 1
    %p99 = por %p97, %p98
    %p100 = scmp.ne.s32.totalorder %s91, %s92
    %p101 = scmp.eq.s32.totalorder %s18, 0
    %p102 = por %p100, %p101
    %p103 = scmp.ne.s32.totalorder %s91, %s92
    %p104 = scmp.eq.s32.totalorder %s19, 1
    %p105 = por %p103, %p104
    %p107 = scmp.ne.s32.totalorder %s92, %s106
    %p108 = scmp.eq.s32.totalorder %s19, 0
    %p109 = por %p107, %p108
    %s111 = sadd.s32 %s110, 1
    %p114 = scmp.eq.s32.totalorder %s13, 1
    %p115 = scmp.ne.s32.totalorder %s110, %s112
    %p116 = scmp.eq.s32.totalorder %s13, 0
    %p117 = por %p115, %p116
    %p118 = scmp.ne.s32.totalorder %s110, %s112
    %p119 = scmp.eq.s32.totalorder %s18, 1
    %p120 = por %p118, %p119
    %p121 = scmp.ne.s32.totalorder %s112, %s113
    %p122 = scmp.eq.s32.totalorder %s18, 0
    %p123 = por %p121, %p122
    %p124 = scmp.ne.s32.totalorder %s112, %s113
    %p125 = scmp.eq.s32.totalorder %s19, 1
    %p126 = por %p124, %p125
    %p128 = scmp.ne.s32.totalorder %s113, %s127
    %p129 = scmp.eq.s32.totalorder %s19, 0
    %p130 = por %p128, %p129
    %s132 = sadd.s32 %s131, 1
    %p135 = scmp.eq.s32.totalorder %s13, 1
    %p136 = scmp.ne.s32.totalorder %s131, %s133
    %p137 = scmp.eq.s32.totalorder %s13, 0
    %p138 = por %p136, %p137
    %p139 = scmp.ne.s32.totalorder %s131, %s133
    %p140 = scmp.eq.s32.totalorder %s18, 1
    %p141 = por %p139, %p140
    %p142 = scmp.ne.s32.totalorder %s133, %s134
    %p143 = scmp.eq.s32.totalorder %s18, 0
    %p144 = por %p142, %p143
    %p145 = scmp.ne.s32.totalorder %s133, %s134
    %p146 = scmp.eq.s32.totalorder %s19, 1
    %p147 = por %p145, %p146
    %p149 = scmp.ne.s32.totalorder %s134, %s148
    %p150 = scmp.eq.s32.totalorder %s19, 0
    %p151 = por %p149, %p150
    %s153 = sadd.s32 %s152, 1
    %p156 = scmp.eq.s32.totalorder %s13, 1
    %p157 = scmp.ne.s32.totalorder %s152, %s154
    %p158 = scmp.eq.s32.totalorder %s13, 0
    %p159 = por %p157, %p158
    %p160 = scmp.ne.s32.totalorder %s152, %s154
    %p161 = scmp.eq.s32.totalorder %s18, 1
    %p162 = por %p160, %p161
    %p163 = scmp.ne.s32.totalorder %s154, %s155
    %p164 = scmp.eq.s32.totalorder %s18, 0
    %p165 = por %p163, %p164
    %p166 = scmp.ne.s32.totalorder %s154, %s155
    %p167 = scmp.eq.s32.totalorder %s19, 1
    %p168 = por %p166, %p167
    %p170 = scmp.ne.s32.totalorder %s155, %s169
    %p171 = scmp.eq.s32.totalorder %s19, 0
    %p172 = por %p170, %p171
    %s173 = ssub.s32 %s13, %s20
    %p174 = scmp.eq.s32.totalorder %s173, 0
    %s176 = sadd.s32 %s175, 1
    %s177 = scalar_select %p174, %s175, %s176
    %p180 = pneg %p174
    %p181 = scmp.eq.s32.totalorder %s13, 1
    %p182 = por %p180, %p181
    %p183 = scmp.ne.s32.totalorder %s175, %s178
    %p184 = scmp.eq.s32.totalorder %s13, 0
    %p185 = por %p183, %p184
    %p186 = scmp.ne.s32.totalorder %s175, %s178
    %p187 = scmp.eq.s32.totalorder %s18, 1
    %p188 = por %p186, %p187
    %p189 = scmp.ne.s32.totalorder %s178, %s179
    %p190 = scmp.eq.s32.totalorder %s18, 0
    %p191 = por %p189, %p190
    %p192 = scmp.ne.s32.totalorder %s178, %s179
    %p193 = scmp.eq.s32.totalorder %s19, 1
    %p194 = por %p192, %p193
    %p196 = scmp.ne.s32.totalorder %s179, %s195
    %p197 = scmp.eq.s32.totalorder %s19, 0
    %p198 = por %p196, %p197
    %p199 = scmp.le.s32.totalorder 1, %s13
    %p200 = scmp.lt.s32.totalorder %s13, 3
    %p201 = pnand %p199, %p200
    %p202 = pneg %p201
    // Predicated region
    $region9: #{clip_text_forward.5} parent=5 // pred_check
      _
    $region10: #{clip_text_forward.5} parent=5 // pred_check_branch
      %204 = sbr.rel (%p201) target = $region12
    $region11: #{clip_text_forward.5} parent=5 // pred_region
      %s205 = ssub.s32 %s13, 1
      // Predicated region
      $region13: #{clip_text_forward.5} parent=11 // pred_check
        %p206 = pneg %p60
      $region14: #{clip_text_forward.5} parent=11 // pred_check_branch
        %208 = sbr.rel (%p206) target = $region16
      $region15: #{clip_text_forward.5} parent=11 // pred_region
        _
      $region16: #{clip_text_forward.5} parent=11 // pred_fallthru
        _
      // Predicated region
      $region17: #{clip_text_forward.5} parent=11 // pred_check
        %p209 = pneg %p81
      $region18: #{clip_text_forward.5} parent=11 // pred_check_branch
        %211 = sbr.rel (%p209) target = $region20
      $region19: #{clip_text_forward.5} parent=11 // pred_region
        _
      $region20: #{clip_text_forward.5} parent=11 // pred_fallthru
        _
      // Predicated region
      $region21: #{clip_text_forward.5} parent=11 // pred_check
        %p212 = pneg %p102
      $region22: #{clip_text_forward.5} parent=11 // pred_check_branch
        %214 = sbr.rel (%p212) target = $region24
      $region23: #{clip_text_forward.5} parent=11 // pred_region
        _
      $region24: #{clip_text_forward.5} parent=11 // pred_fallthru
        _
      // Predicated region
      $region25: #{clip_text_forward.5} parent=11 // pred_check
        %p215 = pneg %p123
      $region26: #{clip_text_forward.5} parent=11 // pred_check_branch
        %217 = sbr.rel (%p215) target = $region28
      $region27: #{clip_text_forward.5} parent=11 // pred_region
        _
      $region28: #{clip_text_forward.5} parent=11 // pred_fallthru
        _
      // Predicated region
      $region29: #{clip_text_forward.5} parent=11 // pred_check
        %p218 = pneg %p144
      $region30: #{clip_text_forward.5} parent=11 // pred_check_branch
        %220 = sbr.rel (%p218) target = $region32
      $region31: #{clip_text_forward.5} parent=11 // pred_region
        _
      $region32: #{clip_text_forward.5} parent=11 // pred_fallthru
        _
      // Predicated region
      $region33: #{clip_text_forward.5} parent=11 // pred_check
        %p221 = pneg %p165
      $region34: #{clip_text_forward.5} parent=11 // pred_check_branch
        %223 = sbr.rel (%p221) target = $region36
      $region35: #{clip_text_forward.5} parent=11 // pred_region
        _
      $region36: #{clip_text_forward.5} parent=11 // pred_fallthru
        _
    $region12: #{clip_text_forward.5} parent=5 // pred_fallthru
      _
    %p224 = scmp.lt.s32.totalorder %s13, 2
    // Predicated region
    $region37: #{clip_text_forward.5} parent=5 // pred_check
      %p225 = pneg %p224
    $region38: #{clip_text_forward.5} parent=5 // pred_check_branch
      %227 = sbr.rel (%p225) target = $region40
    $region39: #{clip_text_forward.5} parent=5 // pred_region
      // Predicated region
      $region41: #{clip_text_forward.5} parent=39 // pred_check
        %p228 = pneg %p33
      $region42: #{clip_text_forward.5} parent=39 // pred_check_branch
        %230 = sbr.rel (%p228) target = $region44
      $region43: #{clip_text_forward.5} parent=39 // pred_region
        %p231 = scmp.lt.s32.totalorder %s13, 1
        %s232 = scalar_select %p231, %s13, 1
        %s233 = smul.addr %s232, 8
        %s234 = scalar_lea.vmem %s0, %s233
      $region44: #{clip_text_forward.5} parent=39 // pred_fallthru
        _
    $region40: #{clip_text_forward.5} parent=5 // pred_fallthru
      _
    %p235 = scmp.le.s32.totalorder 1, %s13
    %p236 = scmp.lt.s32.totalorder %s13, 3
    %p237 = pnand %p235, %p236
    %p238 = pneg %p237
    // Predicated region
    $region45: #{clip_text_forward.5} parent=5 // pred_check
      _
    $region46: #{clip_text_forward.5} parent=5 // pred_check_branch
      %240 = sbr.rel (%p237) target = $region48
    $region47: #{clip_text_forward.5} parent=5 // pred_region
      %s241 = ssub.s32 %s13, 1
      %p242 = scmp.lt.s32.totalorder %s18, 1
      %s243 = scalar_select %p242, %s18, 1
      %s244 = smul.addr %s243, 8
      %s245 = scalar_lea.vmem %s0, %s244
      %p246 = pneg %p39
      %p247 = pneg %p36
      %p248 = pneg %p60
      %p249 = pneg %p57
      %p250 = pneg %p81
      %p251 = pneg %p78
      %p252 = pneg %p102
      %p253 = pneg %p99
      %p254 = pneg %p123
      %p255 = pneg %p120
      %p256 = pneg %p144
      %p257 = pneg %p141
      %p258 = pneg %p165
      %p259 = pneg %p162
      %p260 = pneg %p191
      %p261 = pneg %p188
      %p262 = scmp.lt.s32.totalorder %s18, 1
      %s263 = scalar_select %p262, %s18, 1
      %s264 = smul.addr %s263, 8
      %s265 = scalar_lea.vmem %s7, %s264
      %p266 = scmp.lt.s32.totalorder %s18, 1
      %s267 = scalar_select %p266, %s18, 1
      %s268 = smul.addr %s267, 8
      %s269 = scalar_lea.vmem %s0, %s268
      %p270 = scmp.lt.s32.totalorder %s18, 1
      %s271 = scalar_select %p270, %s18, 1
      %s272 = smul.addr %s271, 8
      %s273 = scalar_lea.vmem %s7, %s272
      %v275 = vld [vmem:[%s269] sm:$0xff]
      %vm276 = vcmask 523264
      %v277 = vsel %vm276, %v275, 0.0
      %278 = vadd.xlane.f32.xlu0 %v277
      %v279 = vpop.xlane.xlu0 %278
      %v280 = vrcp.pop 64.0
      %v281 = vmul.f32 %v279, %v280
      %v282 = vsub.f32 %v275, %v281
      %v283 = vmul.f32 %v282, %v282
      %v284 = vsel %vm276, %v283, 0.0
      %285 = vadd.xlane.f32.xlu0 %v284
      %v286 = vpop.xlane.xlu0 %285
      %v287 = vmul.f32 %v286, %v280
      %v288 = vadd.f32 %v287, 1e-05
      %v289 = vrsqrt.pop %v288
      %v290 = vmul.f32 %v282, %v289
      %v291 = vld [vmem:[%s1] sm:$0x1]
      %v293 = vlaneseq
      %v294 = vshrl.u32 %v293, 7
      %v295 = vsub.s32 0, %v294
      %v296 = vrot.slane %v291, %v295
      %v298 = vmul.f32 %v290, %v296
      %v299 = vld [vmem:[%s2] sm:$0x1]
      %v301 = vlaneseq
      %v302 = vshrl.u32 %v301, 7
      %v303 = vsub.s32 0, %v302
      %v304 = vrot.slane %v299, %v303
      %v306 = vadd.f32 %v298, %v304
      %v307 = vpack.c.bf16 %v306, %v306
      %v308 = vld [vmem:[%s3] sm:$0xff]
      %v309 = vld [vmem:[%s3 + $0x8] sm:$0xff]
      %v310 = vld [vmem:[%s3 + $0x10] sm:$0xff]
      %v311 = vld [vmem:[%s3 + $0x18] sm:$0xff]
      %v312 = vld [vmem:[%s3 + $0x20] sm:$0xff]
      %v313 = vld [vmem:[%s3 + $0x28] sm:$0xff]
      %v314 = vld [vmem:[%s3 + $0x30] sm:$0xff]
      %v315 = vld [vmem:[%s3 + $0x38] sm:$0xff]
      %v316 = vld [vmem:[%s4] sm:$0x3]
      %v318 = vlaneseq
      %v319 = vshrl.u32 %v318, 7
      %v320 = vsub.s32 0, %v319
      %v321 = vrot.slane %v316, %v320
      %v322 = vlaneseq
      %v323 = vshrl.u32 %v322, 7
      %v324 = vsub.s32 1, %v323
      %v325 = vrot.slane %v316, %v324
      %v336 = vunpack.c.l.b16 %v308
      %v337 = vunpack.c.h.b16 %v308
      %v338 = vunpack.c.l.b16 %v309
      %v339 = vunpack.c.h.b16 %v309
      %v340 = vunpack.c.l.b16 %v310
      %v341 = vunpack.c.h.b16 %v310
      %v342 = vunpack.c.l.b16 %v311
      %v343 = vunpack.c.h.b16 %v311
      %v344 = vunpack.c.l.b16 %v312
      %v345 = vunpack.c.h.b16 %v312
      %v346 = vunpack.c.l.b16 %v313
      %v347 = vunpack.c.h.b16 %v313
      %v348 = vunpack.c.l.b16 %v314
      %v349 = vunpack.c.h.b16 %v314
      %v350 = vunpack.c.l.b16 %v315
      %v351 = vunpack.c.h.b16 %v315
      %v352 = vpack.c.b16 %v338, %v336
      %v353 = vpack.c.b16 %v339, %v337
      %v354 = vpack.c.b16 %v342, %v340
      %v355 = vpack.c.b16 %v343, %v341
      %v356 = vpack.c.b16 %v346, %v344
      %v357 = vpack.c.b16 %v347, %v345
      %v358 = vpack.c.b16 %v350, %v348
      %v359 = vpack.c.b16 %v351, %v349
      %v369 = vsel %vm276, %v307, 0
      %371 = vmatprep.subr.bf16.mxu0 0
      %372 = vmatpush1.bf16.msra.mxu0 0
      %373 = vmatprep.subr.bf16.mxu0 0
      %374 = vmatpush1.bf16.msra.mxu0 0
      %375 = vmatprep.subr.bf16.mxu0 0
      %376 = vmatpush1.bf16.msra.mxu0 0
      %377 = vmatprep.subr.bf16.mxu0 0
      %378 = vmatpush1.bf16.msra.mxu0 0
      %379 = vmatprep.subr.bf16.mxu0 %v359
      %380 = vmatpush1.bf16.msra.mxu0 %v358
      %381 = vmatprep.subr.bf16.mxu0 %v357
      %382 = vmatpush1.bf16.msra.mxu0 %v356
      %383 = vmatprep.subr.bf16.mxu0 %v355
      %384 = vmatpush1.bf16.msra.mxu0 %v354
      %385 = vmatprep.subr.bf16.mxu0 %v353
      %386 = vmatpush1.bf16.msra.mxu0 %v352
      %387 = vmatprep.subr.bf16.mxu0 0
      %388 = vmatpush2.bf16.msra.mxu0 0
      %389 = vmatprep.subr.bf16.mxu0 0
      %390 = vmatpush2.bf16.msra.mxu0 0
      %391 = vmatprep.subr.bf16.mxu0 0
      %392 = vmatpush2.bf16.msra.mxu0 0
      %393 = vmatprep.subr.bf16.mxu0 0
      %394 = vmatpush2.bf16.msra.mxu0 0
      %395 = vmatprep.subr.bf16.mxu0 0
      %396 = vmatpush2.bf16.msra.mxu0 0
      %397 = vmatprep.subr.bf16.mxu0 0
      %398 = vmatpush2.bf16.msra.mxu0 0
      %399 = vmatprep.subr.bf16.mxu0 0
      %400 = vmatpush2.bf16.msra.mxu0 0
      %401 = vmatprep.subr.bf16.mxu0 0
      %402 = vmatpush2.bf16.msra.mxu0 0
      %403 = vmatprep.mubr.bf16.mxu0 0
      %404 = vmatmul.mubr.bf16.gmra.mxu0 %v369
      %v405 = vpop.f32.mrf.mxu0
      %v406 = vadd.f32 %v321, %v405
      %v407 = vpop.f32.mrf.mxu0
      %v408 = vadd.f32 %v325, %v407
      %v409 = vpop.f32.mrf.mxu0
      %v410 = vpop.f32.mrf.mxu0
      %411 = vdwg.mxu0
      %412 = vst [vmem:[#allocation2] sm:$0xff] %v406
      %413 = vst.msk [vmem:[#allocation2 + $0x8] sm:$0xff] %vm276, %v408
      %v414 = vlaneseq
      %v415 = vshrl.u32 %v414, 7
      %v416 = vlaneseq
      %v417 = vand.u32 %v416, 127
      %vm418 = vcmp.gt.s32.totalorder %v417, %v415
      %v419 = vsel %vm418, -1e+09, 0.0
      %v420 = vld [vmem:[#allocation2] sm:$0xff]
      %v421 = vpack.c.bf16 %v420, %v420
      %v422 = vld [vmem:[#allocation2 + $0x8] sm:$0xff]
      %v423 = vpack.c.bf16 %v422, %v422
      %425 = vrot.lane.b32.xlu0 %v421, 64
      %v426 = vpop.permute.xlu0 %425
      %vm427 = vcmask 130048
      %v429 = vsel %vm427, %v421, 0
      %v432 = vsel %vm427, %v426, 0
      %434 = vmatprep.subr.bf16.mxu0 0
      %435 = vmatpush1.bf16.xpose.msra.mxu0 0
      %436 = vmatprep.subr.bf16.mxu0 0
      %437 = vmatpush1.bf16.xpose.msra.mxu0 0
      %438 = vmatprep.subr.bf16.mxu0 0
      %439 = vmatpush1.bf16.xpose.msra.mxu0 0
      %440 = vmatprep.subr.bf16.mxu0 0
      %441 = vmatpush1.bf16.xpose.msra.mxu0 0
      %442 = vmatprep.subr.bf16.mxu0 0
      %443 = vmatpush1.bf16.xpose.msra.mxu0 0
      %444 = vmatprep.subr.bf16.mxu0 0
      %445 = vmatpush1.bf16.xpose.msra.mxu0 0
      %446 = vmatprep.subr.bf16.mxu0 0
      %447 = vmatpush1.bf16.xpose.msra.mxu0 0
      %448 = vmatprep.subr.bf16.mxu0 0
      %449 = vmatpush1.bf16.xpose.msra.mxu0 %v432
      %450 = vmatprep.subr.bf16.mxu0 0
      %451 = vmatpush2.bf16.xpose.msra.mxu0 0
      %452 = vmatprep.subr.bf16.mxu0 0
      %453 = vmatpush2.bf16.xpose.msra.mxu0 0
      %454 = vmatprep.subr.bf16.mxu0 0
      %455 = vmatpush2.bf16.xpose.msra.mxu0 0
      %456 = vmatprep.subr.bf16.mxu0 0
      %457 = vmatpush2.bf16.xpose.msra.mxu0 0
      %458 = vmatprep.subr.bf16.mxu0 0
      %459 = vmatpush2.bf16.xpose.msra.mxu0 0
      %460 = vmatprep.subr.bf16.mxu0 0
      %461 = vmatpush2.bf16.xpose.msra.mxu0 0
      %462 = vmatprep.subr.bf16.mxu0 0
      %463 = vmatpush2.bf16.xpose.msra.mxu0 0
      %464 = vmatprep.subr.bf16.mxu0 0
      %465 = vmatpush2.bf16.xpose.msra.mxu0 0
      %466 = vmatprep.mubr.bf16.mxu0 0
      %467 = vmatmul.mubr.bf16.gmra.mxu0 %v429
      %v468 = vpop.f32.mrf.mxu0
      %v469 = vadd.f32 0.0, %v468
      %v470 = vpop.f32.mrf.mxu0
      %v471 = vpop.f32.mrf.mxu0
      %v472 = vpop.f32.mrf.mxu0
      %473 = vdwg.mxu0
      %v474 = vmul.f32 %v469, 0.25
      %v475 = vadd.f32 %v474, %v419
      %vm476 = vcmask 64512
      %v477 = vsel %vm476, %v475, -inf
      %478 = vmax.xlane.f32.xlu0 %v477
      %v479 = vpop.xlane.xlu0 %478
      %v480 = vsub.f32 %v475, %v479
      %v481 = vmul.f32 %v480, 1.442695
      %v482 = vpow.pop %v481
      %v483 = vsel %vm476, %v482, 0.0
      %484 = vadd.xlane.f32.xlu0 %v483
      %v485 = vpop.xlane.xlu0 %484
      %v486 = vrcp.pop %v485
      %v487 = vmul.f32 %v482, %v486
      %v488 = vpack.c.bf16 %v487, %v487
      %v490 = vsel %vm476, %v488, 0
      %vm492 = vcmask 1043456
      %v494 = vsel %vm492, %v423, 0
      %496 = vmatprep.subr.bf16.mxu0 0
      %497 = vmatpush1.bf16.msra.mxu0 0
      %498 = vmatprep.subr.bf16.mxu0 0
      %499 = vmatpush1.bf16.msra.mxu0 0
      %500 = vmatprep.subr.bf16.mxu0 0
      %501 = vmatpush1.bf16.msra.mxu0 0
      %502 = vmatprep.subr.bf16.mxu0 0
      %503 = vmatpush1.bf16.msra.mxu0 0
      %504 = vmatprep.subr.bf16.mxu0 0
      %505 = vmatpush1.bf16.msra.mxu0 0
      %506 = vmatprep.subr.bf16.mxu0 0
      %507 = vmatpush1.bf16.msra.mxu0 0
      %508 = vmatprep.subr.bf16.mxu0 0
      %509 = vmatpush1.bf16.msra.mxu0 0
      %510 = vmatprep.subr.bf16.mxu0 0
      %511 = vmatpush1.bf16.msra.mxu0 %v494
      %512 = vmatprep.subr.bf16.mxu0 0
      %513 = vmatpush2.bf16.msra.mxu0 0
      %514 = vmatprep.subr.bf16.mxu0 0
      %515 = vmatpush2.bf16.msra.mxu0 0
      %516 = vmatprep.subr.bf16.mxu0 0
      %517 = vmatpush2.bf16.msra.mxu0 0
      %518 = vmatprep.subr.bf16.mxu0 0
      %519 = vmatpush2.bf16.msra.mxu0 0
      %520 = vmatprep.subr.bf16.mxu0 0
      %521 = vmatpush2.bf16.msra.mxu0 0
      %522 = vmatprep.subr.bf16.mxu0 0
      %523 = vmatpush2.bf16.msra.mxu0 0
      %524 = vmatprep.subr.bf16.mxu0 0
      %525 = vmatpush2.bf16.msra.mxu0 0
      %526 = vmatprep.subr.bf16.mxu0 0
      %527 = vmatpush2.bf16.msra.mxu0 0
      %528 = vmatprep.mubr.bf16.mxu0 0
      %529 = vmatmul.mubr.bf16.gmra.mxu0 %v490
      %v530 = vpop.f32.mrf.mxu0
      %v531 = vadd.f32 0.0, %v530
      %v532 = vpop.f32.mrf.mxu0
      %v533 = vpop.f32.mrf.mxu0
      %v534 = vpop.f32.mrf.mxu0
      %535 = vdwg.mxu0
      %536 = vst.msk [vmem:[#allocation3] sm:$0xff] %vm427, %v531
      %v537 = vld [vmem:[#allocation2] sm:$0xff]
      %v538 = vpack.c.bf16 %v537, %v537
      %v539 = vld [vmem:[#allocation2 + $0x8] sm:$0xff]
      %v540 = vpack.c.bf16 %v539, %v539
      %542 = vrot.lane.b32.xlu0 %v538, 112
      %v543 = vpop.permute.xlu0 %542
      %544 = vrot.lane.b32.xlu0 %v538, 48
      %v545 = vpop.permute.xlu0 %544
      %v547 = vsel %vm427, %v543, 0
      %v550 = vsel %vm427, %v545, 0
      %552 = vmatprep.subr.bf16.mxu0 0
      %553 = vmatpush1.bf16.xpose.msra.mxu0 0
      %554 = vmatprep.subr.bf16.mxu0 0
      %555 = vmatpush1.bf16.xpose.msra.mxu0 0
      %556 = vmatprep.subr.bf16.mxu0 0
      %557 = vmatpush1.bf16.xpose.msra.mxu0 0
      %558 = vmatprep.subr.bf16.mxu0 0
      %559 = vmatpush1.bf16.xpose.msra.mxu0 0
      %560 = vmatprep.subr.bf16.mxu0 0
      %561 = vmatpush1.bf16.xpose.msra.mxu0 0
      %562 = vmatprep.subr.bf16.mxu0 0
      %563 = vmatpush1.bf16.xpose.msra.mxu0 0
      %564 = vmatprep.subr.bf16.mxu0 0
      %565 = vmatpush1.bf16.xpose.msra.mxu0 0
      %566 = vmatprep.subr.bf16.mxu0 0
      %567 = vmatpush1.bf16.xpose.msra.mxu0 %v550
      %568 = vmatprep.subr.bf16.mxu0 0
      %569 = vmatpush2.bf16.xpose.msra.mxu0 0
      %570 = vmatprep.subr.bf16.mxu0 0
      %571 = vmatpush2.bf16.xpose.msra.mxu0 0
      %572 = vmatprep.subr.bf16.mxu0 0
      %573 = vmatpush2.bf16.xpose.msra.mxu0 0
      %574 = vmatprep.subr.bf16.mxu0 0
      %575 = vmatpush2.bf16.xpose.msra.mxu0 0
      %576 = vmatprep.subr.bf16.mxu0 0
      %577 = vmatpush2.bf16.xpose.msra.mxu0 0
      %578 = vmatprep.subr.bf16.mxu0 0
      %579 = vmatpush2.bf16.xpose.msra.mxu0 0
      %580 = vmatprep.subr.bf16.mxu0 0
      %581 = vmatpush2.bf16.xpose.msra.mxu0 0
      %582 = vmatprep.subr.bf16.mxu0 0
      %583 = vmatpush2.bf16.xpose.msra.mxu0 0
      %584 = vmatprep.mubr.bf16.mxu0 0
      %585 = vmatmul.mubr.bf16.gmra.mxu0 %v547
      %v586 = vpop.f32.mrf.mxu0
      %v587 = vadd.f32 0.0, %v586
      %v588 = vpop.f32.mrf.mxu0
      %v589 = vpop.f32.mrf.mxu0
      %v590 = vpop.f32.mrf.mxu0
      %591 = vdwg.mxu0
      %v592 = vmul.f32 %v587, 0.25
      %v593 = vadd.f32 %v592, %v419
      %v594 = vsel %vm476, %v593, -inf
      %595 = vmax.xlane.f32.xlu0 %v594
      %v596 = vpop.xlane.xlu0 %595
      %v597 = vsub.f32 %v593, %v596
      %v598 = vmul.f32 %v597, 1.442695
      %v599 = vpow.pop %v598
      %v600 = vsel %vm476, %v599, 0.0
      %601 = vadd.xlane.f32.xlu0 %v600
      %v602 = vpop.xlane.xlu0 %601
      %v603 = vrcp.pop %v602
      %v604 = vmul.f32 %v599, %v603
      %v605 = vpack.c.bf16 %v604, %v604
      %607 = vrot.lane.b32.xlu0 %v540, 112
      %v608 = vpop.permute.xlu0 %607
      %v610 = vsel %vm476, %v605, 0
      %v613 = vsel %vm492, %v608, 0
      %615 = vmatprep.subr.bf16.mxu0 0
      %616 = vmatpush1.bf16.msra.mxu0 0
      %617 = vmatprep.subr.bf16.mxu0 0
      %618 = vmatpush1.bf16.msra.mxu0 0
      %619 = vmatprep.subr.bf16.mxu0 0
      %620 = vmatpush1.bf16.msra.mxu0 0
      %621 = vmatprep.subr.bf16.mxu0 0
      %622 = vmatpush1.bf16.msra.mxu0 0
      %623 = vmatprep.subr.bf16.mxu0 0
      %624 = vmatpush1.bf16.msra.mxu0 0
      %625 = vmatprep.subr.bf16.mxu0 0
      %626 = vmatpush1.bf16.msra.mxu0 0
      %627 = vmatprep.subr.bf16.mxu0 0
      %628 = vmatpush1.bf16.msra.mxu0 0
      %629 = vmatprep.subr.bf16.mxu0 0
      %630 = vmatpush1.bf16.msra.mxu0 %v613
      %631 = vmatprep.subr.bf16.mxu0 0
      %632 = vmatpush2.bf16.msra.mxu0 0
      %633 = vmatprep.subr.bf16.mxu0 0
      %634 = vmatpush2.bf16.msra.mxu0 0
      %635 = vmatprep.subr.bf16.mxu0 0
      %636 = vmatpush2.bf16.msra.mxu0 0
      %637 = vmatprep.subr.bf16.mxu0 0
      %638 = vmatpush2.bf16.msra.mxu0 0
      %639 = vmatprep.subr.bf16.mxu0 0
      %640 = vmatpush2.bf16.msra.mxu0 0
      %641 = vmatprep.subr.bf16.mxu0 0
      %642 = vmatpush2.bf16.msra.mxu0 0
      %643 = vmatprep.subr.bf16.mxu0 0
      %644 = vmatpush2.bf16.msra.mxu0 0
      %645 = vmatprep.subr.bf16.mxu0 0
      %646 = vmatpush2.bf16.msra.mxu0 0
      %647 = vmatprep.mubr.bf16.mxu0 0
      %648 = vmatmul.mubr.bf16.gmra.mxu0 %v610
      %v649 = vpop.f32.mrf.mxu0
      %v650 = vadd.f32 0.0, %v649
      %v651 = vpop.f32.mrf.mxu0
      %v652 = vpop.f32.mrf.mxu0
      %v653 = vpop.f32.mrf.mxu0
      %654 = vdwg.mxu0
      %656 = vrot.lane.b32.xlu0 %v650, 16
      %v657 = vpop.permute.xlu0 %656
      %vm659 = vcmask 261248
      %660 = vst.msk [vmem:[#allocation3] sm:$0xff] %vm659, %v657
      %v661 = vld [vmem:[#allocation2] sm:$0xff]
      %v662 = vpack.c.bf16 %v661, %v661
      %v663 = vld [vmem:[#allocation2 + $0x8] sm:$0xff]
      %v664 = vpack.c.bf16 %v663, %v663
      %666 = vrot.lane.b32.xlu0 %v662, 96
      %v667 = vpop.permute.xlu0 %666
      %668 = vrot.lane.b32.xlu0 %v662, 32
      %v669 = vpop.permute.xlu0 %668
      %v671 = vsel %vm427, %v667, 0
      %v674 = vsel %vm427, %v669, 0
      %676 = vmatprep.subr.bf16.mxu0 0
      %677 = vmatpush1.bf16.xpose.msra.mxu0 0
      %678 = vmatprep.subr.bf16.mxu0 0
      %679 = vmatpush1.bf16.xpose.msra.mxu0 0
      %680 = vmatprep.subr.bf16.mxu0 0
      %681 = vmatpush1.bf16.xpose.msra.mxu0 0
      %682 = vmatprep.subr.bf16.mxu0 0
      %683 = vmatpush1.bf16.xpose.msra.mxu0 0
      %684 = vmatprep.subr.bf16.mxu0 0
      %685 = vmatpush1.bf16.xpose.msra.mxu0 0
      %686 = vmatprep.subr.bf16.mxu0 0
      %687 = vmatpush1.bf16.xpose.msra.mxu0 0
      %688 = vmatprep.subr.bf16.mxu0 0
      %689 = vmatpush1.bf16.xpose.msra.mxu0 0
      %690 = vmatprep.subr.bf16.mxu0 0
      %691 = vmatpush1.bf16.xpose.msra.mxu0 %v674
      %692 = vmatprep.subr.bf16.mxu0 0
      %693 = vmatpush2.bf16.xpose.msra.mxu0 0
      %694 = vmatprep.subr.bf16.mxu0 0
      %695 = vmatpush2.bf16.xpose.msra.mxu0 0
      %696 = vmatprep.subr.bf16.mxu0 0
      %697 = vmatpush2.bf16.xpose.msra.mxu0 0
      %698 = vmatprep.subr.bf16.mxu0 0
      %699 = vmatpush2.bf16.xpose.msra.mxu0 0
      %700 = vmatprep.subr.bf16.mxu0 0
      %701 = vmatpush2.bf16.xpose.msra.mxu0 0
      %702 = vmatprep.subr.bf16.mxu0 0
      %703 = vmatpush2.bf16.xpose.msra.mxu0 0
      %704 = vmatprep.subr.bf16.mxu0 0
      %705 = vmatpush2.bf16.xpose.msra.mxu0 0
      %706 = vmatprep.subr.bf16.mxu0 0
      %707 = vmatpush2.bf16.xpose.msra.mxu0 0
      %708 = vmatprep.mubr.bf16.mxu0 0
      %709 = vmatmul.mubr.bf16.gmra.mxu0 %v671
      %v710 = vpop.f32.mrf.mxu0
      %v711 = vadd.f32 0.0, %v710
      %v712 = vpop.f32.mrf.mxu0
      %v713 = vpop.f32.mrf.mxu0
      %v714 = vpop.f32.mrf.mxu0
      %715 = vdwg.mxu0
      %v716 = vmul.f32 %v711, 0.25
      %v717 = vadd.f32 %v716, %v419
      %v718 = vsel %vm476, %v717, -inf
      %719 = vmax.xlane.f32.xlu0 %v718
      %v720 = vpop.xlane.xlu0 %719
      %v721 = vsub.f32 %v717, %v720
      %v722 = vmul.f32 %v721, 1.442695
      %v723 = vpow.pop %v722
      %v724 = vsel %vm476, %v723, 0.0
      %725 = vadd.xlane.f32.xlu0 %v724
      %v726 = vpop.xlane.xlu0 %725
      %v727 = vrcp.pop %v726
      %v728 = vmul.f32 %v723, %v727
      %v729 = vpack.c.bf16 %v728, %v728
      %731 = vrot.lane.b32.xlu0 %v664, 96
      %v732 = vpop.permute.xlu0 %731
      %v734 = vsel %vm476, %v729, 0
      %v737 = vsel %vm492, %v732, 0
      %739 = vmatprep.subr.bf16.mxu0 0
      %740 = vmatpush1.bf16.msra.mxu0 0
      %741 = vmatprep.subr.bf16.mxu0 0
      %742 = vmatpush1.bf16.msra.mxu0 0
      %743 = vmatprep.subr.bf16.mxu0 0
      %744 = vmatpush1.bf16.msra.mxu0 0
      %745 = vmatprep.subr.bf16.mxu0 0
      %746 = vmatpush1.bf16.msra.mxu0 0
      %747 = vmatprep.subr.bf16.mxu0 0
      %748 = vmatpush1.bf16.msra.mxu0 0
      %749 = vmatprep.subr.bf16.mxu0 0
      %750 = vmatpush1.bf16.msra.mxu0 0
      %751 = vmatprep.subr.bf16.mxu0 0
      %752 = vmatpush1.bf16.msra.mxu0 0
      %753 = vmatprep.subr.bf16.mxu0 0
      %754 = vmatpush1.bf16.msra.mxu0 %v737
      %755 = vmatprep.subr.bf16.mxu0 0
      %756 = vmatpush2.bf16.msra.mxu0 0
      %757 = vmatprep.subr.bf16.mxu0 0
      %758 = vmatpush2.bf16.msra.mxu0 0
      %759 = vmatprep.subr.bf16.mxu0 0
      %760 = vmatpush2.bf16.msra.mxu0 0
      %761 = vmatprep.subr.bf16.mxu0 0
      %762 = vmatpush2.bf16.msra.mxu0 0
      %763 = vmatprep.subr.bf16.mxu0 0
      %764 = vmatpush2.bf16.msra.mxu0 0
      %765 = vmatprep.subr.bf16.mxu0 0
      %766 = vmatpush2.bf16.msra.mxu0 0
      %767 = vmatprep.subr.bf16.mxu0 0
      %768 = vmatpush2.bf16.msra.mxu0 0
      %769 = vmatprep.subr.bf16.mxu0 0
      %770 = vmatpush2.bf16.msra.mxu0 0
      %771 = vmatprep.mubr.bf16.mxu0 0
      %772 = vmatmul.mubr.bf16.gmra.mxu0 %v734
      %v773 = vpop.f32.mrf.mxu0
      %v774 = vadd.f32 0.0, %v773
      %v775 = vpop.f32.mrf.mxu0
      %v776 = vpop.f32.mrf.mxu0
      %v777 = vpop.f32.mrf.mxu0
      %778 = vdwg.mxu0
      %780 = vrot.lane.b32.xlu0 %v774, 32
      %v781 = vpop.permute.xlu0 %780
      %vm783 = vcmask 392448
      %784 = vst.msk [vmem:[#allocation3] sm:$0xff] %vm783, %v781
      %v785 = vld [vmem:[#allocation2] sm:$0xff]
      %v786 = vpack.c.bf16 %v785, %v785
      %v787 = vld [vmem:[#allocation2 + $0x8] sm:$0xff]
      %v788 = vpack.c.bf16 %v787, %v787
      %790 = vrot.lane.b32.xlu0 %v786, 80
      %v791 = vpop.permute.xlu0 %790
      %792 = vrot.lane.b32.xlu0 %v786, 16
      %v793 = vpop.permute.xlu0 %792
      %v795 = vsel %vm427, %v791, 0
      %v798 = vsel %vm427, %v793, 0
      %800 = vmatprep.subr.bf16.mxu0 0
      %801 = vmatpush1.bf16.xpose.msra.mxu0 0
      %802 = vmatprep.subr.bf16.mxu0 0
      %803 = vmatpush1.bf16.xpose.msra.mxu0 0
      %804 = vmatprep.subr.bf16.mxu0 0
      %805 = vmatpush1.bf16.xpose.msra.mxu0 0
      %806 = vmatprep.subr.bf16.mxu0 0
      %807 = vmatpush1.bf16.xpose.msra.mxu0 0
      %808 = vmatprep.subr.bf16.mxu0 0
      %809 = vmatpush1.bf16.xpose.msra.mxu0 0
      %810 = vmatprep.subr.bf16.mxu0 0
      %811 = vmatpush1.bf16.xpose.msra.mxu0 0
      %812 = vmatprep.subr.bf16.mxu0 0
      %813 = vmatpush1.bf16.xpose.msra.mxu0 0
      %814 = vmatprep.subr.bf16.mxu0 0
      %815 = vmatpush1.bf16.xpose.msra.mxu0 %v798
      %816 = vmatprep.subr.bf16.mxu0 0
      %817 = vmatpush2.bf16.xpose.msra.mxu0 0
      %818 = vmatprep.subr.bf16.mxu0 0
      %819 = vmatpush2.bf16.xpose.msra.mxu0 0
      %820 = vmatprep.subr.bf16.mxu0 0
      %821 = vmatpush2.bf16.xpose.msra.mxu0 0
      %822 = vmatprep.subr.bf16.mxu0 0
      %823 = vmatpush2.bf16.xpose.msra.mxu0 0
      %824 = vmatprep.subr.bf16.mxu0 0
      %825 = vmatpush2.bf16.xpose.msra.mxu0 0
      %826 = vmatprep.subr.bf16.mxu0 0
      %827 = vmatpush2.bf16.xpose.msra.mxu0 0
      %828 = vmatprep.subr.bf16.mxu0 0
      %829 = vmatpush2.bf16.xpose.msra.mxu0 0
      %830 = vmatprep.subr.bf16.mxu0 0
      %831 = vmatpush2.bf16.xpose.msra.mxu0 0
      %832 = vmatprep.mubr.bf16.mxu0 0
      %833 = vmatmul.mubr.bf16.gmra.mxu0 %v795
      %v834 = vpop.f32.mrf.mxu0
      %v835 = vadd.f32 0.0, %v834
      %v836 = vpop.f32.mrf.mxu0
      %v837 = vpop.f32.mrf.mxu0
      %v838 = vpop.f32.mrf.mxu0
      %839 = vdwg.mxu0
      %v840 = vmul.f32 %v835, 0.25
      %v841 = vadd.f32 %v840, %v419
      %v842 = vsel %vm476, %v841, -inf
      %843 = vmax.xlane.f32.xlu0 %v842
      %v844 = vpop.xlane.xlu0 %843
      %v845 = vsub.f32 %v841, %v844
      %v846 = vmul.f32 %v845, 1.442695
      %v847 = vpow.pop %v846
      %v848 = vsel %vm476, %v847, 0.0
      %849 = vadd.xlane.f32.xlu0 %v848
      %v850 = vpop.xlane.xlu0 %849
      %v851 = vrcp.pop %v850
      %v852 = vmul.f32 %v847, %v851
      %v853 = vpack.c.bf16 %v852, %v852
      %855 = vrot.lane.b32.xlu0 %v788, 80
      %v856 = vpop.permute.xlu0 %855
      %v858 = vsel %vm476, %v853, 0
      %v861 = vsel %vm492, %v856, 0
      %863 = vmatprep.subr.bf16.mxu0 0
      %864 = vmatpush1.bf16.msra.mxu0 0
      %865 = vmatprep.subr.bf16.mxu0 0
      %866 = vmatpush1.bf16.msra.mxu0 0
      %867 = vmatprep.subr.bf16.mxu0 0
      %868 = vmatpush1.bf16.msra.mxu0 0
      %869 = vmatprep.subr.bf16.mxu0 0
      %870 = vmatpush1.bf16.msra.mxu0 0
      %871 = vmatprep.subr.bf16.mxu0 0
      %872 = vmatpush1.bf16.msra.mxu0 0
      %873 = vmatprep.subr.bf16.mxu0 0
      %874 = vmatpush1.bf16.msra.mxu0 0
      %875 = vmatprep.subr.bf16.mxu0 0
      %876 = vmatpush1.bf16.msra.mxu0 0
      %877 = vmatprep.subr.bf16.mxu0 0
      %878 = vmatpush1.bf16.msra.mxu0 %v861
      %879 = vmatprep.subr.bf16.mxu0 0
      %880 = vmatpush2.bf16.msra.mxu0 0
      %881 = vmatprep.subr.bf16.mxu0 0
      %882 = vmatpush2.bf16.msra.mxu0 0
      %883 = vmatprep.subr.bf16.mxu0 0
      %884 = vmatpush2.bf16.msra.mxu0 0
      %885 = vmatprep.subr.bf16.mxu0 0
      %886 = vmatpush2.bf16.msra.mxu0 0
      %887 = vmatprep.subr.bf16.mxu0 0
      %888 = vmatpush2.bf16.msra.mxu0 0
      %889 = vmatprep.subr.bf16.mxu0 0
      %890 = vmatpush2.bf16.msra.mxu0 0
      %891 = vmatprep.subr.bf16.mxu0 0
      %892 = vmatpush2.bf16.msra.mxu0 0
      %893 = vmatprep.subr.bf16.mxu0 0
      %894 = vmatpush2.bf16.msra.mxu0 0
      %895 = vmatprep.mubr.bf16.mxu0 0
      %896 = vmatmul.mubr.bf16.gmra.mxu0 %v858
      %v897 = vpop.f32.mrf.mxu0
      %v898 = vadd.f32 0.0, %v897
      %v899 = vpop.f32.mrf.mxu0
      %v900 = vpop.f32.mrf.mxu0
      %v901 = vpop.f32.mrf.mxu0
      %902 = vdwg.mxu0
      %904 = vrot.lane.b32.xlu0 %v898, 48
      %v905 = vpop.permute.xlu0 %904
      %vm907 = vcmask 523648
      %908 = vst.msk [vmem:[#allocation3] sm:$0xff] %vm907, %v905
      %v909 = vld [vmem:[#allocation3] sm:$0xff]
      %v910 = vpack.c.bf16 %v909, %v909
      %v911 = vld [vmem:[%s5] sm:$0xf]
      %v912 = vld [vmem:[%s5 + $0x4] sm:$0xf]
      %v913 = vld [vmem:[%s5 + $0x8] sm:$0xf]
      %v914 = vld [vmem:[%s5 + $0xc] sm:$0xf]
      %v915 = vld [vmem:[%s5 + $0x10] sm:$0xf]
      %v916 = vld [vmem:[%s5 + $0x14] sm:$0xf]
      %v917 = vld [vmem:[%s5 + $0x18] sm:$0xf]
      %v918 = vld [vmem:[%s5 + $0x1c] sm:$0xf]
      %v927 = vunpack.c.l.b16 %v911
      %v928 = vunpack.c.l.b16 %v912
      %v929 = vunpack.c.l.b16 %v913
      %v930 = vunpack.c.l.b16 %v914
      %v931 = vunpack.c.l.b16 %v915
      %v932 = vunpack.c.l.b16 %v916
      %v933 = vunpack.c.l.b16 %v917
      %v934 = vunpack.c.l.b16 %v918
      %v935 = vpack.c.b16 %v928, %v927
      %v936 = vpack.c.b16 %v930, %v929
      %v937 = vpack.c.b16 %v932, %v931
      %v938 = vpack.c.b16 %v934, %v933
      %v944 = vsel %vm276, %v910, 0
      %946 = vmatprep.subr.bf16.mxu0 0
      %947 = vmatpush1.bf16.msra.mxu0 0
      %948 = vmatprep.subr.bf16.mxu0 0
      %949 = vmatpush1.bf16.msra.mxu0 0
      %950 = vmatprep.subr.bf16.mxu0 0
      %951 = vmatpush1.bf16.msra.mxu0 0
      %952 = vmatprep.subr.bf16.mxu0 0
      %953 = vmatpush1.bf16.msra.mxu0 0
      %954 = vmatprep.subr.bf16.mxu0 0
      %955 = vmatpush1.bf16.msra.mxu0 %v938
      %956 = vmatprep.subr.bf16.mxu0 0
      %957 = vmatpush1.bf16.msra.mxu0 %v937
      %958 = vmatprep.subr.bf16.mxu0 0
      %959 = vmatpush1.bf16.msra.mxu0 %v936
      %960 = vmatprep.subr.bf16.mxu0 0
      %961 = vmatpush1.bf16.msra.mxu0 %v935
      %962 = vmatprep.subr.bf16.mxu0 0
      %963 = vmatpush2.bf16.msra.mxu0 0
      %964 = vmatprep.subr.bf16.mxu0 0
      %965 = vmatpush2.bf16.msra.mxu0 0
      %966 = vmatprep.subr.bf16.mxu0 0
      %967 = vmatpush2.bf16.msra.mxu0 0
      %968 = vmatprep.subr.bf16.mxu0 0
      %969 = vmatpush2.bf16.msra.mxu0 0
      %970 = vmatprep.subr.bf16.mxu0 0
      %971 = vmatpush2.bf16.msra.mxu0 0
      %972 = vmatprep.subr.bf16.mxu0 0
      %973 = vmatpush2.bf16.msra.mxu0 0
      %974 = vmatprep.subr.bf16.mxu0 0
      %975 = vmatpush2.bf16.msra.mxu0 0
      %976 = vmatprep.subr.bf16.mxu0 0
      %977 = vmatpush2.bf16.msra.mxu0 0
      %978 = vmatprep.mubr.bf16.mxu0 0
      %979 = vmatmul.mubr.bf16.gmra.mxu0 %v944
      %v980 = vpop.f32.mrf.mxu0
      %v981 = vadd.f32 0.0, %v980
      %v982 = vpop.f32.mrf.mxu0
      %v983 = vpop.f32.mrf.mxu0
      %v984 = vpop.f32.mrf.mxu0
      %985 = vdwg.mxu0
      %v986 = vld [vmem:[%s269] sm:$0xff]
      %v987 = vadd.f32 %v986, %v981
      %v988 = vld [vmem:[%s6] sm:$0x1]
      %v990 = vlaneseq
      %v991 = vshrl.u32 %v990, 7
      %v992 = vsub.s32 0, %v991
      %v993 = vrot.slane %v988, %v992
      %v995 = vadd.f32 %v987, %v993
      %996 = vst.msk [vmem:[%s273] sm:$0xff] %vm276, %v995
      %p997 = scmp.lt.s32.totalorder %s18, 1
      %s998 = scalar_select %p997, %s18, 1
      %s999 = smul.addr %s998, 8
      %s1000 = scalar_lea.vmem %s7, %s999
      // Predicated region
      $region49: #{clip_text_forward.5} parent=47 // pred_check
        %p1001 = pneg %p188
      $region50: #{clip_text_forward.5} parent=47 // pred_check_branch
        %1003 = sbr.rel (%p1001) target = $region52
      $region51: #{clip_text_forward.5} parent=47 // pred_region
        _
      $region52: #{clip_text_forward.5} parent=47 // pred_fallthru
        _
    $region48: #{clip_text_forward.5} parent=5 // pred_fallthru
      _
    %p1004 = scmp.le.s32.totalorder 2, %s13
    // Predicated region
    $region53: #{clip_text_forward.5} parent=5 // pred_check
      %p1005 = pneg %p1004
    $region54: #{clip_text_forward.5} parent=5 // pred_check_branch
      %1007 = sbr.rel (%p1005) target = $region56
    $region55: #{clip_text_forward.5} parent=5 // pred_region
      %s1008 = ssub.s32 %s13, 2
      // Predicated region
      $region57: #{clip_text_forward.5} parent=55 // pred_check
        %p1009 = pneg %p194
      $region58: #{clip_text_forward.5} parent=55 // pred_check_branch
        %1011 = sbr.rel (%p1009) target = $region60
      $region59: #{clip_text_forward.5} parent=55 // pred_region
        %p1012 = scmp.lt.s32.totalorder %s19, 1
        %s1013 = scalar_select %p1012, %s19, 1
        %s1014 = smul.addr %s1013, 8
        %s1015 = scalar_lea.vmem %s7, %s1014
      $region60: #{clip_text_forward.5} parent=55 // pred_fallthru
        _
    $region56: #{clip_text_forward.5} parent=5 // pred_fallthru
      _
  $region6: #{clip_text_forward.5} parent=0 // loop_footer
    %s17 = sadd.s32 1, %s13
  $region7: #{clip_text_forward.5} parent=0 // loop_footer_branch
    %12 = sbr.rel target = $region3
  $region8: #{clip_text_forward.5} parent=0 // loop_exit
    _

</llo_original>
